<compile_context>
chip_gen: v7x
topology: tpu7x:2x2x1
jax: 0.10.0
libtpu: 0.0.40
codegen_flags: <defaults>
</compile_context>

<pallas_src>
import math

import jax
import jax.numpy as jnp
from jax import lax
from jax.experimental import pallas as pl
from jax.experimental.pallas import tpu as pltpu

C_IN = 32       # vocabulary size (c_in in the PyTorch module)
D_MODEL = 128   # embedding dim (d_model)
C_PAD = 128     # table rows padded to a full lane tile (zeros beyond C_IN)
TM = 1024       # tokens per grid step (sweep 512-2048; ~1 MiB x2 buffers in VMEM)


def _fixed_sinusoid_table(c_in, d_model):
    """Deterministic construction matching the PyTorch __init__ exactly."""
    position = jnp.arange(c_in, dtype=jnp.float32)[:, None]             # (c_in, 1)
    div_term = jnp.exp(
        jnp.arange(0, d_model, 2, dtype=jnp.float32)
        * -(math.log(10000.0) / d_model))                               # (d_model//2,)
    w = jnp.zeros((c_in, d_model), jnp.float32)
    w = w.at[:, 0::2].set(jnp.sin(position * div_term))
    w = w.at[:, 1::2].set(jnp.cos(position * div_term))
    return w


def _embed_kernel(idx_ref, w_ref, o_ref):
    # idx_ref: (1, 1, TM) int32, lane-dense indices for this tile
    # w_ref:   (C_PAD, D_MODEL) padded sinusoidal table (resident in VMEM)
    # o_ref:   (TM, D_MODEL) gathered embeddings
    tm = idx_ref.shape[-1]
    c_pad = w_ref.shape[0]

    idx = idx_ref[0]                                                    # (1, TM)
    rows = lax.broadcasted_iota(jnp.int32, (c_pad, tm), 0)              # (C_PAD, TM)
    onehot_t = (rows == idx).astype(jnp.float32)                        # (C_PAD, TM)

    # out[t, d] = sum_c onehot_t[c, t] * w[c, d]  -> transposed-LHS MXU matmul
    o_ref[...] = lax.dot_general(
        onehot_t, w_ref[...],
        dimension_numbers=(((0,), (0,)), ((), ())),
        preferred_element_type=jnp.float32,
    ).astype(o_ref.dtype)


def fixed_embedding(x, w, *, tm=TM):
    """x: (B, S) integer indices in [0, C_IN). Returns (B, S, D_MODEL) float32."""
    B, S = x.shape
    N = B * S
    num_tiles = -(-N // tm)          # ceil div
    n_pad = num_tiles * tm

    idx = x.reshape(N).astype(jnp.int32)
    if n_pad != N:
        idx = jnp.pad(idx, (0, n_pad - N))        # pad with index 0 (valid row)
    idx3d = idx.reshape(num_tiles, 1, tm)         # lane-dense index layout

    c_in, d_model = w.shape
    w_pad = w if c_in >= C_PAD else jnp.pad(w, ((0, C_PAD - c_in), (0, 0)))

    cost = pl.CostEstimate(
        flops=2 * n_pad * C_PAD * d_model,
        transcendentals=0,
        bytes_accessed=n_pad * 4 + n_pad * d_model * 4 + C_PAD * d_model * 4,
    )

    out = pl.pallas_call(
        _embed_kernel,
        out_shape=jax.ShapeDtypeStruct((n_pad, d_model), jnp.float32),
        grid_spec=pltpu.PrefetchScalarGridSpec(
            num_scalar_prefetch=0,
            grid=(num_tiles,),
            in_specs=[
                pl.BlockSpec((1, 1, tm), lambda i: (i, 0, 0)),        # index tile
                pl.BlockSpec((C_PAD, d_model), lambda i: (0, 0)),     # full table
            ],
            out_specs=pl.BlockSpec((tm, d_model), lambda i: (i, 0)),
        ),
        compiler_params=pltpu.CompilerParams(
            dimension_semantics=("parallel",)),
        cost_estimate=cost,
    )(idx3d, w_pad)

    if n_pad != N:
        out = out[:N]
    return out.reshape(B, S, d_model)


if __name__ == "__main__":
    key = jax.random.PRNGKey(0)
    B, S = 2, 8
    x = jax.random.randint(key, (B, S), 0, C_IN, dtype=jnp.int32)

    w = _fixed_sinusoid_table(C_IN, D_MODEL)

    out = fixed_embedding(x, w)
    out = jax.block_until_ready(out)

    # Reference check (plain JAX gather) — same semantics as self.emb(x).detach()
    ref = w[x]
    assert out.shape == (B, S, D_MODEL)
    assert out.dtype == jnp.float32
    assert jnp.allclose(out, ref, atol=1e-6), "mismatch vs reference gather"

    # Also check a non-multiple-of-TM shape to exercise the padding path.
    B2, S2 = 3, 37
    x2 = jax.random.randint(jax.random.PRNGKey(1), (B2, S2), 0, C_IN, dtype=jnp.int32)
    out2 = jax.block_until_ready(fixed_embedding(x2, w))
    assert jnp.allclose(out2, w[x2], atol=1e-6), "mismatch on padded-tail path"

    print("KERNEL_OK")
</pallas_src>

<mosaic_0001>
module attributes {stable_mosaic.version = 11 : i64} {
  func.func @_embed_kernel(%arg0: i32, %arg1: memref<1x1x1024xi32, #tpu.memory_space<vmem>>, %arg2: memref<128x128xf32, #tpu.memory_space<vmem>>, %arg3: memref<1024x128xf32, #tpu.memory_space<vmem>>) attributes {dimension_semantics = [#tpu.dimension_semantics<parallel>], iteration_bounds = array<i64: 1>, scalar_prefetch = 0 : i64, scratch_operands = 0 : i64, tpu.core_type = #tpu.core_type<tc>, window_params = [{transform_indices = @transform_0, window_bounds = array<i64: 1, 1, 1024>}, {pipeline_mode = #tpu.pipeline_mode<synchronous>, transform_indices = @transform_1, window_bounds = array<i64: 128, 128>}, {transform_indices = @transform_2, window_bounds = array<i64: 1024, 128>}]} {
    %c0 = arith.constant 0 : index
    %c0_0 = arith.constant 0 : index
    %c0_1 = arith.constant 0 : index
    %0 = vector.load %arg1[%c0, %c0_0, %c0_1] : memref<1x1x1024xi32, #tpu.memory_space<vmem>>, vector<1x1x1024xi32>
    %1 = vector.shape_cast %0 : vector<1x1x1024xi32> to vector<1x1024xi32>
    %2 = tpu.iota {dimensions = array<i32: 0>} : vector<128x1024xi32>
    %3 = vector.broadcast %1 : vector<1x1024xi32> to vector<128x1024xi32>
    %4 = arith.cmpi eq, %2, %3 : vector<128x1024xi32>
    %5 = arith.extui %4 : vector<128x1024xi1> to vector<128x1024xi32>
    %6 = arith.sitofp %5 : vector<128x1024xi32> to vector<128x1024xf32>
    %c0_2 = arith.constant 0 : index
    %c0_3 = arith.constant 0 : index
    %7 = vector.load %arg2[%c0_2, %c0_3] : memref<128x128xf32, #tpu.memory_space<vmem>>, vector<128x128xf32>
    %cst = arith.constant dense<0.000000e+00> : vector<1024x128xf32>
    %8 = tpu.matmul %6, %7, %cst {dimension_numbers = #tpu.dot_dimension_numbers<[0], [0], [1], [1], [0, 1, 1, 1], [], []>} : vector<128x1024xf32>, vector<128x128xf32>, vector<1024x128xf32> -> vector<1024x128xf32>
    %c0_4 = arith.constant 0 : index
    %c0_5 = arith.constant 0 : index
    %9 = vector.load %arg3[%c0_4, %c0_5] : memref<1024x128xf32, #tpu.memory_space<vmem>>, vector<1024x128xf32>
    tpu.vector_store %arg3[%c0_4, %c0_5], %8 {strides = array<i32>} : memref<1024x128xf32, #tpu.memory_space<vmem>>, vector<1024x128xf32>,
    return
  }
  func.func @transform_0(%arg0: i32) -> (i32, i32, i32) {
    %c0_i32 = arith.constant 0 : i32
    %c0_i32_0 = arith.constant 0 : i32
    %c0_i32_1 = arith.constant 0 : i32
    return %arg0, %c0_i32, %c0_i32_0 : i32, i32, i32
  }
  func.func @transform_1(%arg0: i32) -> (i32, i32) {
    %c0_i32 = arith.constant 0 : i32
    %c0_i32_0 = arith.constant 0 : i32
    %c0_i32_1 = arith.constant 0 : i32
    return %c0_i32, %c0_i32_0 : i32, i32
  }
  func.func @transform_2(%arg0: i32) -> (i32, i32) {
    %c0_i32 = arith.constant 0 : i32
    %c0_i32_0 = arith.constant 0 : i32
    return %arg0, %c0_i32 : i32, i32
  }
}

</mosaic_0001>

<llo_original>
// kernel: tpu_custom_call.1
$region0: #{tpu_custom_call.1}
  #allocation0 [shape = 'u32[]', space=smem, size = 0x4, offset = 0x4, fixed_abs, tag = 'smem constant byte address 0x4 - core index']
  #allocation1 [shape = 'u32[144,128]{1,0:T(1,128)}', space=vmem, size = 0x12000, scoped, tag = 'internal scratch']
  %s0 = inlined_call_operand.hbm [shape: s32[1,1,1024], index: 0, kind: input, shape index: {}]
  %s1 = inlined_call_operand.hbm [shape: f32[128,128], index: 1, kind: input, shape index: {}]
  %s2 = inlined_call_operand.hbm [shape: f32[1024,128], index: 2, kind: output, shape index: {}]
  %s3 = sld [smem:[#allocation0]]
  $region26: #{tpu_custom_call.1} parent=0
    _
  %s5 = ssub.s32 1, %s3
  %s6 = scalar_select 0, %s5, %s3
  $region1: #{tpu_custom_call.1} parent=0
    #allocation2 [shape = 'u8[4096]{0}', space=vmem, size = 0x1000, scoped, tag = 'input window, operand 0, single buffered']
    #allocation3 [shape = 's32[1]{0}', space=sflag, size = 0x4, scoped, tag = 'scoped memory for tpu_custom_call.1']
    #allocation4 [shape = 's32[1]{0}', space=sflag, size = 0x4, scoped, tag = 'scoped memory for tpu_custom_call.1']
    #allocation5 [shape = 'u8[65536]{0}', space=vmem, size = 0x10000, scoped, tag = 'input window, operand 1, single buffered']
    #allocation6 [shape = 's32[1]{0}', space=sflag, size = 0x4, scoped, tag = 'scoped memory for tpu_custom_call.1']
    #allocation7 [shape = 'u8[524288]{0}', space=vmem, size = 0x80000, scoped, tag = 'output window, operand 0, single buffered']
    %7 = vsyncpa [#allocation3], 0
    %8 = vsyncpa [#allocation6], 0
    %9 = vsyncpa [#allocation4], 0
    // Predicated region
    $region2: #{tpu_custom_call.1} parent=1 // pred_check
      _
    $region3: #{tpu_custom_call.1} parent=1 // pred_check_branch
      %11 = sbr.rel (0) target = $region5
    $region4: #{tpu_custom_call.1} parent=1 // pred_region
      %s13 = ssub.s32 128, 128
      %14 = vsyncadd [#allocation3], %s13
      %s16 = sshll.u32 [#allocation2], 4
      %s17 = int_to_ptr.vmem [resolvable:$true] %s16
      %19 = dma.hbm_to_vmem [thread:$0]  %s0, 128, %s17, [#allocation3]
    $region5: #{tpu_custom_call.1} parent=1 // pred_fallthru
      _
    // Predicated region
    $region6: #{tpu_custom_call.1} parent=1 // pred_check
      _
    $region7: #{tpu_custom_call.1} parent=1 // pred_check_branch
      %21 = sbr.rel (0) target = $region9
    $region8: #{tpu_custom_call.1} parent=1 // pred_region
      %s23 = ssub.s32 2048, 2048
      %24 = vsyncadd [#allocation6], %s23
      %s25 = sshll.u32 [#allocation5], 4
      %s26 = int_to_ptr.vmem [resolvable:$true] %s25
      %31 = dma.hbm_to_vmem [thread:$0]  %s1, 2048, %s26, [#allocation6], 128, 128, 8
    $region9: #{tpu_custom_call.1} parent=1 // pred_fallthru
      _
    // Predicated region
    $region10: #{tpu_custom_call.1} parent=1 // pred_check
      _
    $region11: #{tpu_custom_call.1} parent=1 // pred_check_branch
      %33 = sbr.rel (0) target = $region13
    $region12: #{tpu_custom_call.1} parent=1 // pred_region
      %34 = dma.done [#allocation3], 128
    $region13: #{tpu_custom_call.1} parent=1 // pred_fallthru
      _
    // Predicated region
    $region14: #{tpu_custom_call.1} parent=1 // pred_check
      _
    $region15: #{tpu_custom_call.1} parent=1 // pred_check_branch
      %36 = sbr.rel (0) target = $region17
    $region16: #{tpu_custom_call.1} parent=1 // pred_region
      %37 = dma.done [#allocation6], 2048
    $region17: #{tpu_custom_call.1} parent=1 // pred_fallthru
      _
    %v38 = vld [vmem:[#allocation2] sm:$0xff]
    %v39 = vlaneseq
    %v40 = vshrl.u32 %v39, 7
    %v41 = vadd.s32 %v40, 8
    %v42 = vadd.s32 %v40, 16
    %v43 = vadd.s32 %v40, 24
    %v44 = vadd.s32 %v40, 32
    %v45 = vadd.s32 %v40, 40
    %v46 = vadd.s32 %v40, 48
    %v47 = vadd.s32 %v40, 56
    %v48 = vadd.s32 %v40, 64
    %v49 = vadd.s32 %v40, 72
    %v50 = vadd.s32 %v40, 80
    %v51 = vadd.s32 %v40, 88
    %v52 = vadd.s32 %v40, 96
    %v53 = vadd.s32 %v40, 104
    %v54 = vadd.s32 %v40, 112
    %v55 = vadd.s32 %v40, 120
    %v56 = vlaneseq
    %v57 = vshrl.u32 %v56, 7
    %v58 = vsub.s32 0, %v57
    %v59 = vrot.slane %v38, %v58
    %v60 = vlaneseq
    %v61 = vshrl.u32 %v60, 7
    %v62 = vsub.s32 1, %v61
    %v63 = vrot.slane %v38, %v62
    %v64 = vlaneseq
    %v65 = vshrl.u32 %v64, 7
    %v66 = vsub.s32 2, %v65
    %v67 = vrot.slane %v38, %v66
    %v68 = vlaneseq
    %v69 = vshrl.u32 %v68, 7
    %v70 = vsub.s32 3, %v69
    %v71 = vrot.slane %v38, %v70
    %v72 = vlaneseq
    %v73 = vshrl.u32 %v72, 7
    %v74 = vsub.s32 4, %v73
    %v75 = vrot.slane %v38, %v74
    %v76 = vlaneseq
    %v77 = vshrl.u32 %v76, 7
    %v78 = vsub.s32 5, %v77
    %v79 = vrot.slane %v38, %v78
    %v80 = vlaneseq
    %v81 = vshrl.u32 %v80, 7
    %v82 = vsub.s32 6, %v81
    %v83 = vrot.slane %v38, %v82
    %v84 = vlaneseq
    %v85 = vshrl.u32 %v84, 7
    %v86 = vsub.s32 7, %v85
    %v87 = vrot.slane %v38, %v86
    %vm88 = vcmp.eq.s32.totalorder %v40, %v59
    %vm89 = vcmp.eq.s32.totalorder %v40, %v63
    %vm90 = vcmp.eq.s32.totalorder %v40, %v67
    %vm91 = vcmp.eq.s32.totalorder %v40, %v71
    %vm92 = vcmp.eq.s32.totalorder %v40, %v75
    %vm93 = vcmp.eq.s32.totalorder %v40, %v79
    %vm94 = vcmp.eq.s32.totalorder %v40, %v83
    %vm95 = vcmp.eq.s32.totalorder %v40, %v87
    %vm96 = vcmp.eq.s32.totalorder %v41, %v59
    %vm97 = vcmp.eq.s32.totalorder %v41, %v63
    %vm98 = vcmp.eq.s32.totalorder %v41, %v67
    %vm99 = vcmp.eq.s32.totalorder %v41, %v71
    %vm100 = vcmp.eq.s32.totalorder %v41, %v75
    %vm101 = vcmp.eq.s32.totalorder %v41, %v79
    %vm102 = vcmp.eq.s32.totalorder %v41, %v83
    %vm103 = vcmp.eq.s32.totalorder %v41, %v87
    %vm104 = vcmp.eq.s32.totalorder %v42, %v59
    %vm105 = vcmp.eq.s32.totalorder %v42, %v63
    %vm106 = vcmp.eq.s32.totalorder %v42, %v67
    %vm107 = vcmp.eq.s32.totalorder %v42, %v71
    %vm108 = vcmp.eq.s32.totalorder %v42, %v75
    %vm109 = vcmp.eq.s32.totalorder %v42, %v79
    %vm110 = vcmp.eq.s32.totalorder %v42, %v83
    %vm111 = vcmp.eq.s32.totalorder %v42, %v87
    %vm112 = vcmp.eq.s32.totalorder %v43, %v59
    %vm113 = vcmp.eq.s32.totalorder %v43, %v63
    %vm114 = vcmp.eq.s32.totalorder %v43, %v67
    %vm115 = vcmp.eq.s32.totalorder %v43, %v71
    %vm116 = vcmp.eq.s32.totalorder %v43, %v75
    %vm117 = vcmp.eq.s32.totalorder %v43, %v79
    %vm118 = vcmp.eq.s32.totalorder %v43, %v83
    %vm119 = vcmp.eq.s32.totalorder %v43, %v87
    %vm120 = vcmp.eq.s32.totalorder %v44, %v59
    %vm121 = vcmp.eq.s32.totalorder %v44, %v63
    %vm122 = vcmp.eq.s32.totalorder %v44, %v67
    %vm123 = vcmp.eq.s32.totalorder %v44, %v71
    %vm124 = vcmp.eq.s32.totalorder %v44, %v75
    %vm125 = vcmp.eq.s32.totalorder %v44, %v79
    %vm126 = vcmp.eq.s32.totalorder %v44, %v83
    %vm127 = vcmp.eq.s32.totalorder %v44, %v87
    %vm128 = vcmp.eq.s32.totalorder %v45, %v59
    %vm129 = vcmp.eq.s32.totalorder %v45, %v63
    %vm130 = vcmp.eq.s32.totalorder %v45, %v67
    %vm131 = vcmp.eq.s32.totalorder %v45, %v71
    %vm132 = vcmp.eq.s32.totalorder %v45, %v75
    %vm133 = vcmp.eq.s32.totalorder %v45, %v79
    %vm134 = vcmp.eq.s32.totalorder %v45, %v83
    %vm135 = vcmp.eq.s32.totalorder %v45, %v87
    %vm136 = vcmp.eq.s32.totalorder %v46, %v59
    %vm137 = vcmp.eq.s32.totalorder %v46, %v63
    %vm138 = vcmp.eq.s32.totalorder %v46, %v67
    %vm139 = vcmp.eq.s32.totalorder %v46, %v71
    %vm140 = vcmp.eq.s32.totalorder %v46, %v75
    %vm141 = vcmp.eq.s32.totalorder %v46, %v79
    %vm142 = vcmp.eq.s32.totalorder %v46, %v83
    %vm143 = vcmp.eq.s32.totalorder %v46, %v87
    %vm144 = vcmp.eq.s32.totalorder %v47, %v59
    %vm145 = vcmp.eq.s32.totalorder %v47, %v63
    %vm146 = vcmp.eq.s32.totalorder %v47, %v67
    %vm147 = vcmp.eq.s32.totalorder %v47, %v71
    %vm148 = vcmp.eq.s32.totalorder %v47, %v75
    %vm149 = vcmp.eq.s32.totalorder %v47, %v79
    %vm150 = vcmp.eq.s32.totalorder %v47, %v83
    %vm151 = vcmp.eq.s32.totalorder %v47, %v87
    %vm152 = vcmp.eq.s32.totalorder %v48, %v59
    %vm153 = vcmp.eq.s32.totalorder %v48, %v63
    %vm154 = vcmp.eq.s32.totalorder %v48, %v67
    %vm155 = vcmp.eq.s32.totalorder %v48, %v71
    %vm156 = vcmp.eq.s32.totalorder %v48, %v75
    %vm157 = vcmp.eq.s32.totalorder %v48, %v79
    %vm158 = vcmp.eq.s32.totalorder %v48, %v83
    %vm159 = vcmp.eq.s32.totalorder %v48, %v87
    %vm160 = vcmp.eq.s32.totalorder %v49, %v59
    %vm161 = vcmp.eq.s32.totalorder %v49, %v63
    %vm162 = vcmp.eq.s32.totalorder %v49, %v67
    %vm163 = vcmp.eq.s32.totalorder %v49, %v71
    %vm164 = vcmp.eq.s32.totalorder %v49, %v75
    %vm165 = vcmp.eq.s32.totalorder %v49, %v79
    %vm166 = vcmp.eq.s32.totalorder %v49, %v83
    %vm167 = vcmp.eq.s32.totalorder %v49, %v87
    %vm168 = vcmp.eq.s32.totalorder %v50, %v59
    %vm169 = vcmp.eq.s32.totalorder %v50, %v63
    %vm170 = vcmp.eq.s32.totalorder %v50, %v67
    %vm171 = vcmp.eq.s32.totalorder %v50, %v71
    %vm172 = vcmp.eq.s32.totalorder %v50, %v75
    %vm173 = vcmp.eq.s32.totalorder %v50, %v79
    %vm174 = vcmp.eq.s32.totalorder %v50, %v83
    %vm175 = vcmp.eq.s32.totalorder %v50, %v87
    %vm176 = vcmp.eq.s32.totalorder %v51, %v59
    %vm177 = vcmp.eq.s32.totalorder %v51, %v63
    %vm178 = vcmp.eq.s32.totalorder %v51, %v67
    %vm179 = vcmp.eq.s32.totalorder %v51, %v71
    %vm180 = vcmp.eq.s32.totalorder %v51, %v75
    %vm181 = vcmp.eq.s32.totalorder %v51, %v79
    %vm182 = vcmp.eq.s32.totalorder %v51, %v83
    %vm183 = vcmp.eq.s32.totalorder %v51, %v87
    %vm184 = vcmp.eq.s32.totalorder %v52, %v59
    %vm185 = vcmp.eq.s32.totalorder %v52, %v63
    %vm186 = vcmp.eq.s32.totalorder %v52, %v67
    %vm187 = vcmp.eq.s32.totalorder %v52, %v71
    %vm188 = vcmp.eq.s32.totalorder %v52, %v75
    %vm189 = vcmp.eq.s32.totalorder %v52, %v79
    %vm190 = vcmp.eq.s32.totalorder %v52, %v83
    %vm191 = vcmp.eq.s32.totalorder %v52, %v87
    %vm192 = vcmp.eq.s32.totalorder %v53, %v59
    %vm193 = vcmp.eq.s32.totalorder %v53, %v63
    %vm194 = vcmp.eq.s32.totalorder %v53, %v67
    %vm195 = vcmp.eq.s32.totalorder %v53, %v71
    %vm196 = vcmp.eq.s32.totalorder %v53, %v75
    %vm197 = vcmp.eq.s32.totalorder %v53, %v79
    %vm198 = vcmp.eq.s32.totalorder %v53, %v83
    %vm199 = vcmp.eq.s32.totalorder %v53, %v87
    %vm200 = vcmp.eq.s32.totalorder %v54, %v59
    %vm201 = vcmp.eq.s32.totalorder %v54, %v63
    %vm202 = vcmp.eq.s32.totalorder %v54, %v67
    %vm203 = vcmp.eq.s32.totalorder %v54, %v71
    %vm204 = vcmp.eq.s32.totalorder %v54, %v75
    %vm205 = vcmp.eq.s32.totalorder %v54, %v79
    %vm206 = vcmp.eq.s32.totalorder %v54, %v83
    %vm207 = vcmp.eq.s32.totalorder %v54, %v87
    %vm208 = vcmp.eq.s32.totalorder %v55, %v59
    %vm209 = vcmp.eq.s32.totalorder %v55, %v63
    %vm210 = vcmp.eq.s32.totalorder %v55, %v67
    %vm211 = vcmp.eq.s32.totalorder %v55, %v71
    %vm212 = vcmp.eq.s32.totalorder %v55, %v75
    %vm213 = vcmp.eq.s32.totalorder %v55, %v79
    %vm214 = vcmp.eq.s32.totalorder %v55, %v83
    %vm215 = vcmp.eq.s32.totalorder %v55, %v87
    %v216 = vsel %vm88, 1, 0
    %v217 = vsel %vm89, 1, 0
    %v218 = vsel %vm90, 1, 0
    %v219 = vsel %vm91, 1, 0
    %v220 = vsel %vm92, 1, 0
    %v221 = vsel %vm93, 1, 0
    %v222 = vsel %vm94, 1, 0
    %v223 = vsel %vm95, 1, 0
    %v224 = vsel %vm96, 1, 0
    %v225 = vsel %vm97, 1, 0
    %v226 = vsel %vm98, 1, 0
    %v227 = vsel %vm99, 1, 0
    %v228 = vsel %vm100, 1, 0
    %v229 = vsel %vm101, 1, 0
    %v230 = vsel %vm102, 1, 0
    %v231 = vsel %vm103, 1, 0
    %v232 = vsel %vm104, 1, 0
    %v233 = vsel %vm105, 1, 0
    %v234 = vsel %vm106, 1, 0
    %v235 = vsel %vm107, 1, 0
    %v236 = vsel %vm108, 1, 0
    %v237 = vsel %vm109, 1, 0
    %v238 = vsel %vm110, 1, 0
    %v239 = vsel %vm111, 1, 0
    %v240 = vsel %vm112, 1, 0
    %v241 = vsel %vm113, 1, 0
    %v242 = vsel %vm114, 1, 0
    %v243 = vsel %vm115, 1, 0
    %v244 = vsel %vm116, 1, 0
    %v245 = vsel %vm117, 1, 0
    %v246 = vsel %vm118, 1, 0
    %v247 = vsel %vm119, 1, 0
    %v248 = vsel %vm120, 1, 0
    %v249 = vsel %vm121, 1, 0
    %v250 = vsel %vm122, 1, 0
    %v251 = vsel %vm123, 1, 0
    %v252 = vsel %vm124, 1, 0
    %v253 = vsel %vm125, 1, 0
    %v254 = vsel %vm126, 1, 0
    %v255 = vsel %vm127, 1, 0
    %v256 = vsel %vm128, 1, 0
    %v257 = vsel %vm129, 1, 0
    %v258 = vsel %vm130, 1, 0
    %v259 = vsel %vm131, 1, 0
    %v260 = vsel %vm132, 1, 0
    %v261 = vsel %vm133, 1, 0
    %v262 = vsel %vm134, 1, 0
    %v263 = vsel %vm135, 1, 0
    %v264 = vsel %vm136, 1, 0
    %v265 = vsel %vm137, 1, 0
    %v266 = vsel %vm138, 1, 0
    %v267 = vsel %vm139, 1, 0
    %v268 = vsel %vm140, 1, 0
    %v269 = vsel %vm141, 1, 0
    %v270 = vsel %vm142, 1, 0
    %v271 = vsel %vm143, 1, 0
    %v272 = vsel %vm144, 1, 0
    %v273 = vsel %vm145, 1, 0
    %v274 = vsel %vm146, 1, 0
    %v275 = vsel %vm147, 1, 0
    %v276 = vsel %vm148, 1, 0
    %v277 = vsel %vm149, 1, 0
    %v278 = vsel %vm150, 1, 0
    %v279 = vsel %vm151, 1, 0
    %v280 = vsel %vm152, 1, 0
    %v281 = vsel %vm153, 1, 0
    %v282 = vsel %vm154, 1, 0
    %v283 = vsel %vm155, 1, 0
    %v284 = vsel %vm156, 1, 0
    %v285 = vsel %vm157, 1, 0
    %v286 = vsel %vm158, 1, 0
    %v287 = vsel %vm159, 1, 0
    %v288 = vsel %vm160, 1, 0
    %v289 = vsel %vm161, 1, 0
    %v290 = vsel %vm162, 1, 0
    %v291 = vsel %vm163, 1, 0
    %v292 = vsel %vm164, 1, 0
    %v293 = vsel %vm165, 1, 0
    %v294 = vsel %vm166, 1, 0
    %v295 = vsel %vm167, 1, 0
    %v296 = vsel %vm168, 1, 0
    %v297 = vsel %vm169, 1, 0
    %v298 = vsel %vm170, 1, 0
    %v299 = vsel %vm171, 1, 0
    %v300 = vsel %vm172, 1, 0
    %v301 = vsel %vm173, 1, 0
    %v302 = vsel %vm174, 1, 0
    %v303 = vsel %vm175, 1, 0
    %v304 = vsel %vm176, 1, 0
    %v305 = vsel %vm177, 1, 0
    %v306 = vsel %vm178, 1, 0
    %v307 = vsel %vm179, 1, 0
    %v308 = vsel %vm180, 1, 0
    %v309 = vsel %vm181, 1, 0
    %v310 = vsel %vm182, 1, 0
    %v311 = vsel %vm183, 1, 0
    %v312 = vsel %vm184, 1, 0
    %v313 = vsel %vm185, 1, 0
    %v314 = vsel %vm186, 1, 0
    %v315 = vsel %vm187, 1, 0
    %v316 = vsel %vm188, 1, 0
    %v317 = vsel %vm189, 1, 0
    %v318 = vsel %vm190, 1, 0
    %v319 = vsel %vm191, 1, 0
    %v320 = vsel %vm192, 1, 0
    %v321 = vsel %vm193, 1, 0
    %v322 = vsel %vm194, 1, 0
    %v323 = vsel %vm195, 1, 0
    %v324 = vsel %vm196, 1, 0
    %v325 = vsel %vm197, 1, 0
    %v326 = vsel %vm198, 1, 0
    %v327 = vsel %vm199, 1, 0
    %v328 = vsel %vm200, 1, 0
    %v329 = vsel %vm201, 1, 0
    %v330 = vsel %vm202, 1, 0
    %v331 = vsel %vm203, 1, 0
    %v332 = vsel %vm204, 1, 0
    %v333 = vsel %vm205, 1, 0
    %v334 = vsel %vm206, 1, 0
    %v335 = vsel %vm207, 1, 0
    %v336 = vsel %vm208, 1, 0
    %v337 = vsel %vm209, 1, 0
    %v338 = vsel %vm210, 1, 0
    %v339 = vsel %vm211, 1, 0
    %v340 = vsel %vm212, 1, 0
    %v341 = vsel %vm213, 1, 0
    %v342 = vsel %vm214, 1, 0
    %v343 = vsel %vm215, 1, 0
    %v344 = vcvt.s32.f32 %v216
    %v345 = vcvt.s32.f32 %v217
    %v346 = vcvt.s32.f32 %v218
    %v347 = vcvt.s32.f32 %v219
    %v348 = vcvt.s32.f32 %v220
    %v349 = vcvt.s32.f32 %v221
    %v350 = vcvt.s32.f32 %v222
    %v351 = vcvt.s32.f32 %v223
    %v352 = vcvt.s32.f32 %v224
    %v353 = vcvt.s32.f32 %v225
    %v354 = vcvt.s32.f32 %v226
    %v355 = vcvt.s32.f32 %v227
    %v356 = vcvt.s32.f32 %v228
    %v357 = vcvt.s32.f32 %v229
    %v358 = vcvt.s32.f32 %v230
    %v359 = vcvt.s32.f32 %v231
    %v360 = vcvt.s32.f32 %v232
    %v361 = vcvt.s32.f32 %v233
    %v362 = vcvt.s32.f32 %v234
    %v363 = vcvt.s32.f32 %v235
    %v364 = vcvt.s32.f32 %v236
    %v365 = vcvt.s32.f32 %v237
    %v366 = vcvt.s32.f32 %v238
    %v367 = vcvt.s32.f32 %v239
    %v368 = vcvt.s32.f32 %v240
    %v369 = vcvt.s32.f32 %v241
    %v370 = vcvt.s32.f32 %v242
    %v371 = vcvt.s32.f32 %v243
    %v372 = vcvt.s32.f32 %v244
    %v373 = vcvt.s32.f32 %v245
    %v374 = vcvt.s32.f32 %v246
    %v375 = vcvt.s32.f32 %v247
    %v376 = vcvt.s32.f32 %v248
    %v377 = vcvt.s32.f32 %v249
    %v378 = vcvt.s32.f32 %v250
    %v379 = vcvt.s32.f32 %v251
    %v380 = vcvt.s32.f32 %v252
    %v381 = vcvt.s32.f32 %v253
    %v382 = vcvt.s32.f32 %v254
    %v383 = vcvt.s32.f32 %v255
    %v384 = vcvt.s32.f32 %v256
    %v385 = vcvt.s32.f32 %v257
    %v386 = vcvt.s32.f32 %v258
    %v387 = vcvt.s32.f32 %v259
    %v388 = vcvt.s32.f32 %v260
    %v389 = vcvt.s32.f32 %v261
    %v390 = vcvt.s32.f32 %v262
    %v391 = vcvt.s32.f32 %v263
    %v392 = vcvt.s32.f32 %v264
    %v393 = vcvt.s32.f32 %v265
    %v394 = vcvt.s32.f32 %v266
    %v395 = vcvt.s32.f32 %v267
    %v396 = vcvt.s32.f32 %v268
    %v397 = vcvt.s32.f32 %v269
    %v398 = vcvt.s32.f32 %v270
    %v399 = vcvt.s32.f32 %v271
    %v400 = vcvt.s32.f32 %v272
    %v401 = vcvt.s32.f32 %v273
    %v402 = vcvt.s32.f32 %v274
    %v403 = vcvt.s32.f32 %v275
    %v404 = vcvt.s32.f32 %v276
    %v405 = vcvt.s32.f32 %v277
    %v406 = vcvt.s32.f32 %v278
    %v407 = vcvt.s32.f32 %v279
    %v408 = vcvt.s32.f32 %v280
    %v409 = vcvt.s32.f32 %v281
    %v410 = vcvt.s32.f32 %v282
    %v411 = vcvt.s32.f32 %v283
    %v412 = vcvt.s32.f32 %v284
    %v413 = vcvt.s32.f32 %v285
    %v414 = vcvt.s32.f32 %v286
    %v415 = vcvt.s32.f32 %v287
    %v416 = vcvt.s32.f32 %v288
    %v417 = vcvt.s32.f32 %v289
    %v418 = vcvt.s32.f32 %v290
    %v419 = vcvt.s32.f32 %v291
    %v420 = vcvt.s32.f32 %v292
    %v421 = vcvt.s32.f32 %v293
    %v422 = vcvt.s32.f32 %v294
    %v423 = vcvt.s32.f32 %v295
    %v424 = vcvt.s32.f32 %v296
    %v425 = vcvt.s32.f32 %v297
    %v426 = vcvt.s32.f32 %v298
    %v427 = vcvt.s32.f32 %v299
    %v428 = vcvt.s32.f32 %v300
    %v429 = vcvt.s32.f32 %v301
    %v430 = vcvt.s32.f32 %v302
    %v431 = vcvt.s32.f32 %v303
    %v432 = vcvt.s32.f32 %v304
    %v433 = vcvt.s32.f32 %v305
    %v434 = vcvt.s32.f32 %v306
    %v435 = vcvt.s32.f32 %v307
    %v436 = vcvt.s32.f32 %v308
    %v437 = vcvt.s32.f32 %v309
    %v438 = vcvt.s32.f32 %v310
    %v439 = vcvt.s32.f32 %v311
    %v440 = vcvt.s32.f32 %v312
    %v441 = vcvt.s32.f32 %v313
    %v442 = vcvt.s32.f32 %v314
    %v443 = vcvt.s32.f32 %v315
    %v444 = vcvt.s32.f32 %v316
    %v445 = vcvt.s32.f32 %v317
    %v446 = vcvt.s32.f32 %v318
    %v447 = vcvt.s32.f32 %v319
    %v448 = vcvt.s32.f32 %v320
    %v449 = vcvt.s32.f32 %v321
    %v450 = vcvt.s32.f32 %v322
    %v451 = vcvt.s32.f32 %v323
    %v452 = vcvt.s32.f32 %v324
    %v453 = vcvt.s32.f32 %v325
    %v454 = vcvt.s32.f32 %v326
    %v455 = vcvt.s32.f32 %v327
    %v456 = vcvt.s32.f32 %v328
    %v457 = vcvt.s32.f32 %v329
    %v458 = vcvt.s32.f32 %v330
    %v459 = vcvt.s32.f32 %v331
    %v460 = vcvt.s32.f32 %v332
    %v461 = vcvt.s32.f32 %v333
    %v462 = vcvt.s32.f32 %v334
    %v463 = vcvt.s32.f32 %v335
    %v464 = vcvt.s32.f32 %v336
    %v465 = vcvt.s32.f32 %v337
    %v466 = vcvt.s32.f32 %v338
    %v467 = vcvt.s32.f32 %v339
    %v468 = vcvt.s32.f32 %v340
    %v469 = vcvt.s32.f32 %v341
    %v470 = vcvt.s32.f32 %v342
    %v471 = vcvt.s32.f32 %v343
    %v472 = vld [vmem:[#allocation5] sm:$0xff]
    %v473 = vld [vmem:[#allocation5 + $0x8] sm:$0xff]
    %v474 = vld [vmem:[#allocation5 + $0x10] sm:$0xff]
    %v475 = vld [vmem:[#allocation5 + $0x18] sm:$0xff]
    %v476 = vld [vmem:[#allocation5 + $0x20] sm:$0xff]
    %v477 = vld [vmem:[#allocation5 + $0x28] sm:$0xff]
    %v478 = vld [vmem:[#allocation5 + $0x30] sm:$0xff]
    %v479 = vld [vmem:[#allocation5 + $0x38] sm:$0xff]
    %v480 = vld [vmem:[#allocation5 + $0x40] sm:$0xff]
    %v481 = vld [vmem:[#allocation5 + $0x48] sm:$0xff]
    %v482 = vld [vmem:[#allocation5 + $0x50] sm:$0xff]
    %v483 = vld [vmem:[#allocation5 + $0x58] sm:$0xff]
    %v484 = vld [vmem:[#allocation5 + $0x60] sm:$0xff]
    %v485 = vld [vmem:[#allocation5 + $0x68] sm:$0xff]
    %v486 = vld [vmem:[#allocation5 + $0x70] sm:$0xff]
    %v487 = vld [vmem:[#allocation5 + $0x78] sm:$0xff]
    %488 = vxpose.xlu0.b32.start [1/16] %v344, 128
    %489 = vxpose.xlu0.b32.cont [2/16] %v352, 128
    %490 = vxpose.xlu0.b32.cont [3/16] %v360, 128
    %491 = vxpose.xlu0.b32.cont [4/16] %v368, 128
    %492 = vxpose.xlu0.b32.cont [5/16] %v376, 128
    %493 = vxpose.xlu0.b32.cont [6/16] %v384, 128
    %494 = vxpose.xlu0.b32.cont [7/16] %v392, 128
    %495 = vxpose.xlu0.b32.cont [8/16] %v400, 128
    %496 = vxpose.xlu0.b32.cont [9/16] %v408, 128
    %497 = vxpose.xlu0.b32.cont [10/16] %v416, 128
    %498 = vxpose.xlu0.b32.cont [11/16] %v424, 128
    %499 = vxpose.xlu0.b32.cont [12/16] %v432, 128
    %500 = vxpose.xlu0.b32.cont [13/16] %v440, 128
    %501 = vxpose.xlu0.b32.cont [14/16] %v448, 128
    %502 = vxpose.xlu0.b32.cont [15/16] %v456, 128
    %503 = vxpose.xlu0.b32.end [16/16] %v464, 128
    %v504 = vpop.trf.xlu0
    %v505 = vpop.trf.xlu0
    %v506 = vpop.trf.xlu0
    %v507 = vpop.trf.xlu0
    %v508 = vpop.trf.xlu0
    %v509 = vpop.trf.xlu0
    %v510 = vpop.trf.xlu0
    %v511 = vpop.trf.xlu0
    %v512 = vpop.trf.xlu0
    %v513 = vpop.trf.xlu0
    %v514 = vpop.trf.xlu0
    %v515 = vpop.trf.xlu0
    %v516 = vpop.trf.xlu0
    %v517 = vpop.trf.xlu0
    %v518 = vpop.trf.xlu0
    %v519 = vpop.trf.xlu0
    %520 = vxpose.xlu0.b32.start [1/16] %v345, 128
    %521 = vxpose.xlu0.b32.cont [2/16] %v353, 128
    %522 = vxpose.xlu0.b32.cont [3/16] %v361, 128
    %523 = vxpose.xlu0.b32.cont [4/16] %v369, 128
    %524 = vxpose.xlu0.b32.cont [5/16] %v377, 128
    %525 = vxpose.xlu0.b32.cont [6/16] %v385, 128
    %526 = vxpose.xlu0.b32.cont [7/16] %v393, 128
    %527 = vxpose.xlu0.b32.cont [8/16] %v401, 128
    %528 = vxpose.xlu0.b32.cont [9/16] %v409, 128
    %529 = vxpose.xlu0.b32.cont [10/16] %v417, 128
    %530 = vxpose.xlu0.b32.cont [11/16] %v425, 128
    %531 = vxpose.xlu0.b32.cont [12/16] %v433, 128
    %532 = vxpose.xlu0.b32.cont [13/16] %v441, 128
    %533 = vxpose.xlu0.b32.cont [14/16] %v449, 128
    %534 = vxpose.xlu0.b32.cont [15/16] %v457, 128
    %535 = vxpose.xlu0.b32.end [16/16] %v465, 128
    %v536 = vpop.trf.xlu0
    %v537 = vpop.trf.xlu0
    %v538 = vpop.trf.xlu0
    %v539 = vpop.trf.xlu0
    %v540 = vpop.trf.xlu0
    %v541 = vpop.trf.xlu0
    %v542 = vpop.trf.xlu0
    %v543 = vpop.trf.xlu0
    %v544 = vpop.trf.xlu0
    %v545 = vpop.trf.xlu0
    %v546 = vpop.trf.xlu0
    %v547 = vpop.trf.xlu0
    %v548 = vpop.trf.xlu0
    %v549 = vpop.trf.xlu0
    %v550 = vpop.trf.xlu0
    %v551 = vpop.trf.xlu0
    %552 = vxpose.xlu0.b32.start [1/16] %v346, 128
    %553 = vxpose.xlu0.b32.cont [2/16] %v354, 128
    %554 = vxpose.xlu0.b32.cont [3/16] %v362, 128
    %555 = vxpose.xlu0.b32.cont [4/16] %v370, 128
    %556 = vxpose.xlu0.b32.cont [5/16] %v378, 128
    %557 = vxpose.xlu0.b32.cont [6/16] %v386, 128
    %558 = vxpose.xlu0.b32.cont [7/16] %v394, 128
    %559 = vxpose.xlu0.b32.cont [8/16] %v402, 128
    %560 = vxpose.xlu0.b32.cont [9/16] %v410, 128
    %561 = vxpose.xlu0.b32.cont [10/16] %v418, 128
    %562 = vxpose.xlu0.b32.cont [11/16] %v426, 128
    %563 = vxpose.xlu0.b32.cont [12/16] %v434, 128
    %564 = vxpose.xlu0.b32.cont [13/16] %v442, 128
    %565 = vxpose.xlu0.b32.cont [14/16] %v450, 128
    %566 = vxpose.xlu0.b32.cont [15/16] %v458, 128
    %567 = vxpose.xlu0.b32.end [16/16] %v466, 128
    %v568 = vpop.trf.xlu0
    %v569 = vpop.trf.xlu0
    %v570 = vpop.trf.xlu0
    %v571 = vpop.trf.xlu0
    %v572 = vpop.trf.xlu0
    %v573 = vpop.trf.xlu0
    %v574 = vpop.trf.xlu0
    %v575 = vpop.trf.xlu0
    %v576 = vpop.trf.xlu0
    %v577 = vpop.trf.xlu0
    %v578 = vpop.trf.xlu0
    %v579 = vpop.trf.xlu0
    %v580 = vpop.trf.xlu0
    %v581 = vpop.trf.xlu0
    %v582 = vpop.trf.xlu0
    %v583 = vpop.trf.xlu0
    %584 = vxpose.xlu0.b32.start [1/16] %v347, 128
    %585 = vxpose.xlu0.b32.cont [2/16] %v355, 128
    %586 = vxpose.xlu0.b32.cont [3/16] %v363, 128
    %587 = vxpose.xlu0.b32.cont [4/16] %v371, 128
    %588 = vxpose.xlu0.b32.cont [5/16] %v379, 128
    %589 = vxpose.xlu0.b32.cont [6/16] %v387, 128
    %590 = vxpose.xlu0.b32.cont [7/16] %v395, 128
    %591 = vxpose.xlu0.b32.cont [8/16] %v403, 128
    %592 = vxpose.xlu0.b32.cont [9/16] %v411, 128
    %593 = vxpose.xlu0.b32.cont [10/16] %v419, 128
    %594 = vxpose.xlu0.b32.cont [11/16] %v427, 128
    %595 = vxpose.xlu0.b32.cont [12/16] %v435, 128
    %596 = vxpose.xlu0.b32.cont [13/16] %v443, 128
    %597 = vxpose.xlu0.b32.cont [14/16] %v451, 128
    %598 = vxpose.xlu0.b32.cont [15/16] %v459, 128
    %599 = vxpose.xlu0.b32.end [16/16] %v467, 128
    %v600 = vpop.trf.xlu0
    %v601 = vpop.trf.xlu0
    %v602 = vpop.trf.xlu0
    %v603 = vpop.trf.xlu0
    %v604 = vpop.trf.xlu0
    %v605 = vpop.trf.xlu0
    %v606 = vpop.trf.xlu0
    %v607 = vpop.trf.xlu0
    %v608 = vpop.trf.xlu0
    %v609 = vpop.trf.xlu0
    %v610 = vpop.trf.xlu0
    %v611 = vpop.trf.xlu0
    %v612 = vpop.trf.xlu0
    %v613 = vpop.trf.xlu0
    %v614 = vpop.trf.xlu0
    %v615 = vpop.trf.xlu0
    %616 = vxpose.xlu0.b32.start [1/16] %v348, 128
    %617 = vxpose.xlu0.b32.cont [2/16] %v356, 128
    %618 = vxpose.xlu0.b32.cont [3/16] %v364, 128
    %619 = vxpose.xlu0.b32.cont [4/16] %v372, 128
    %620 = vxpose.xlu0.b32.cont [5/16] %v380, 128
    %621 = vxpose.xlu0.b32.cont [6/16] %v388, 128
    %622 = vxpose.xlu0.b32.cont [7/16] %v396, 128
    %623 = vxpose.xlu0.b32.cont [8/16] %v404, 128
    %624 = vxpose.xlu0.b32.cont [9/16] %v412, 128
    %625 = vxpose.xlu0.b32.cont [10/16] %v420, 128
    %626 = vxpose.xlu0.b32.cont [11/16] %v428, 128
    %627 = vxpose.xlu0.b32.cont [12/16] %v436, 128
    %628 = vxpose.xlu0.b32.cont [13/16] %v444, 128
    %629 = vxpose.xlu0.b32.cont [14/16] %v452, 128
    %630 = vxpose.xlu0.b32.cont [15/16] %v460, 128
    %631 = vxpose.xlu0.b32.end [16/16] %v468, 128
    %v632 = vpop.trf.xlu0
    %v633 = vpop.trf.xlu0
    %v634 = vpop.trf.xlu0
    %v635 = vpop.trf.xlu0
    %v636 = vpop.trf.xlu0
    %v637 = vpop.trf.xlu0
    %v638 = vpop.trf.xlu0
    %v639 = vpop.trf.xlu0
    %v640 = vpop.trf.xlu0
    %v641 = vpop.trf.xlu0
    %v642 = vpop.trf.xlu0
    %v643 = vpop.trf.xlu0
    %v644 = vpop.trf.xlu0
    %v645 = vpop.trf.xlu0
    %v646 = vpop.trf.xlu0
    %v647 = vpop.trf.xlu0
    %648 = vxpose.xlu0.b32.start [1/16] %v349, 128
    %649 = vxpose.xlu0.b32.cont [2/16] %v357, 128
    %650 = vxpose.xlu0.b32.cont [3/16] %v365, 128
    %651 = vxpose.xlu0.b32.cont [4/16] %v373, 128
    %652 = vxpose.xlu0.b32.cont [5/16] %v381, 128
    %653 = vxpose.xlu0.b32.cont [6/16] %v389, 128
    %654 = vxpose.xlu0.b32.cont [7/16] %v397, 128
    %655 = vxpose.xlu0.b32.cont [8/16] %v405, 128
    %656 = vxpose.xlu0.b32.cont [9/16] %v413, 128
    %657 = vxpose.xlu0.b32.cont [10/16] %v421, 128
    %658 = vxpose.xlu0.b32.cont [11/16] %v429, 128
    %659 = vxpose.xlu0.b32.cont [12/16] %v437, 128
    %660 = vxpose.xlu0.b32.cont [13/16] %v445, 128
    %661 = vxpose.xlu0.b32.cont [14/16] %v453, 128
    %662 = vxpose.xlu0.b32.cont [15/16] %v461, 128
    %663 = vxpose.xlu0.b32.end [16/16] %v469, 128
    %v664 = vpop.trf.xlu0
    %v665 = vpop.trf.xlu0
    %v666 = vpop.trf.xlu0
    %v667 = vpop.trf.xlu0
    %v668 = vpop.trf.xlu0
    %v669 = vpop.trf.xlu0
    %v670 = vpop.trf.xlu0
    %v671 = vpop.trf.xlu0
    %v672 = vpop.trf.xlu0
    %v673 = vpop.trf.xlu0
    %v674 = vpop.trf.xlu0
    %v675 = vpop.trf.xlu0
    %v676 = vpop.trf.xlu0
    %v677 = vpop.trf.xlu0
    %v678 = vpop.trf.xlu0
    %v679 = vpop.trf.xlu0
    %680 = vxpose.xlu0.b32.start [1/16] %v350, 128
    %681 = vxpose.xlu0.b32.cont [2/16] %v358, 128
    %682 = vxpose.xlu0.b32.cont [3/16] %v366, 128
    %683 = vxpose.xlu0.b32.cont [4/16] %v374, 128
    %684 = vxpose.xlu0.b32.cont [5/16] %v382, 128
    %685 = vxpose.xlu0.b32.cont [6/16] %v390, 128
    %686 = vxpose.xlu0.b32.cont [7/16] %v398, 128
    %687 = vxpose.xlu0.b32.cont [8/16] %v406, 128
    %688 = vxpose.xlu0.b32.cont [9/16] %v414, 128
    %689 = vxpose.xlu0.b32.cont [10/16] %v422, 128
    %690 = vxpose.xlu0.b32.cont [11/16] %v430, 128
    %691 = vxpose.xlu0.b32.cont [12/16] %v438, 128
    %692 = vxpose.xlu0.b32.cont [13/16] %v446, 128
    %693 = vxpose.xlu0.b32.cont [14/16] %v454, 128
    %694 = vxpose.xlu0.b32.cont [15/16] %v462, 128
    %695 = vxpose.xlu0.b32.end [16/16] %v470, 128
    %v696 = vpop.trf.xlu0
    %v697 = vpop.trf.xlu0
    %v698 = vpop.trf.xlu0
    %v699 = vpop.trf.xlu0
    %v700 = vpop.trf.xlu0
    %v701 = vpop.trf.xlu0
    %v702 = vpop.trf.xlu0
    %v703 = vpop.trf.xlu0
    %v704 = vpop.trf.xlu0
    %v705 = vpop.trf.xlu0
    %v706 = vpop.trf.xlu0
    %v707 = vpop.trf.xlu0
    %v708 = vpop.trf.xlu0
    %v709 = vpop.trf.xlu0
    %v710 = vpop.trf.xlu0
    %v711 = vpop.trf.xlu0
    %712 = vxpose.xlu0.b32.start [1/16] %v351, 128
    %713 = vxpose.xlu0.b32.cont [2/16] %v359, 128
    %714 = vxpose.xlu0.b32.cont [3/16] %v367, 128
    %715 = vxpose.xlu0.b32.cont [4/16] %v375, 128
    %716 = vxpose.xlu0.b32.cont [5/16] %v383, 128
    %717 = vxpose.xlu0.b32.cont [6/16] %v391, 128
    %718 = vxpose.xlu0.b32.cont [7/16] %v399, 128
    %719 = vxpose.xlu0.b32.cont [8/16] %v407, 128
    %720 = vxpose.xlu0.b32.cont [9/16] %v415, 128
    %721 = vxpose.xlu0.b32.cont [10/16] %v423, 128
    %722 = vxpose.xlu0.b32.cont [11/16] %v431, 128
    %723 = vxpose.xlu0.b32.cont [12/16] %v439, 128
    %724 = vxpose.xlu0.b32.cont [13/16] %v447, 128
    %725 = vxpose.xlu0.b32.cont [14/16] %v455, 128
    %726 = vxpose.xlu0.b32.cont [15/16] %v463, 128
    %727 = vxpose.xlu0.b32.end [16/16] %v471, 128
    %v728 = vpop.trf.xlu0
    %v729 = vpop.trf.xlu0
    %v730 = vpop.trf.xlu0
    %v731 = vpop.trf.xlu0
    %v732 = vpop.trf.xlu0
    %v733 = vpop.trf.xlu0
    %v734 = vpop.trf.xlu0
    %v735 = vpop.trf.xlu0
    %v736 = vpop.trf.xlu0
    %v737 = vpop.trf.xlu0
    %v738 = vpop.trf.xlu0
    %v739 = vpop.trf.xlu0
    %v740 = vpop.trf.xlu0
    %v741 = vpop.trf.xlu0
    %v742 = vpop.trf.xlu0
    %v743 = vpop.trf.xlu0
    %744 = vmatprep.subr.mxu0 0.0
    %745 = vmatpush1.msra.mxu0 %v472
    %746 = vmatprep.subr.mxu0 0.0
    %747 = vmatpush1.msra.mxu0 %v473
    %748 = vmatprep.subr.mxu0 0.0
    %749 = vmatpush1.msra.mxu0 %v474
    %750 = vmatprep.subr.mxu0 0.0
    %751 = vmatpush1.msra.mxu0 %v475
    %752 = vmatprep.subr.mxu0 0.0
    %753 = vmatpush1.msra.mxu0 %v476
    %754 = vmatprep.subr.mxu0 0.0
    %755 = vmatpush1.msra.mxu0 %v477
    %756 = vmatprep.subr.mxu0 0.0
    %757 = vmatpush1.msra.mxu0 %v478
    %758 = vmatprep.subr.mxu0 0.0
    %759 = vmatpush1.msra.mxu0 %v479
    %760 = vmatprep.subr.mxu0 0.0
    %761 = vmatpush1.msra.mxu0 %v480
    %762 = vmatprep.subr.mxu0 0.0
    %763 = vmatpush1.msra.mxu0 %v481
    %764 = vmatprep.subr.mxu0 0.0
    %765 = vmatpush1.msra.mxu0 %v482
    %766 = vmatprep.subr.mxu0 0.0
    %767 = vmatpush1.msra.mxu0 %v483
    %768 = vmatprep.subr.mxu0 0.0
    %769 = vmatpush1.msra.mxu0 %v484
    %770 = vmatprep.subr.mxu0 0.0
    %771 = vmatpush1.msra.mxu0 %v485
    %772 = vmatprep.subr.mxu0 0.0
    %773 = vmatpush1.msra.mxu0 %v486
    %774 = vmatprep.subr.mxu0 0.0
    %775 = vmatpush1.msra.mxu0 %v487
    %776 = vmatprep.subr.mxu0 0.0
    %777 = vmatpush1.msra.mxu0 0.0
    %778 = vmatprep.subr.mxu0 0.0
    %779 = vmatpush1.msra.mxu0 0.0
    %780 = vmatprep.subr.mxu0 0.0
    %781 = vmatpush1.msra.mxu0 0.0
    %782 = vmatprep.subr.mxu0 0.0
    %783 = vmatpush1.msra.mxu0 0.0
    %784 = vmatprep.subr.mxu0 0.0
    %785 = vmatpush1.msra.mxu0 0.0
    %786 = vmatprep.subr.mxu0 0.0
    %787 = vmatpush1.msra.mxu0 0.0
    %788 = vmatprep.subr.mxu0 0.0
    %789 = vmatpush1.msra.mxu0 0.0
    %790 = vmatprep.subr.mxu0 0.0
    %791 = vmatpush1.msra.mxu0 0.0
    %792 = vmatprep.subr.mxu0 0.0
    %793 = vmatpush1.msra.mxu0 0.0
    %794 = vmatprep.subr.mxu0 0.0
    %795 = vmatpush1.msra.mxu0 0.0
    %796 = vmatprep.subr.mxu0 0.0
    %797 = vmatpush1.msra.mxu0 0.0
    %798 = vmatprep.subr.mxu0 0.0
    %799 = vmatpush1.msra.mxu0 0.0
    %800 = vmatprep.subr.mxu0 0.0
    %801 = vmatpush1.msra.mxu0 0.0
    %802 = vmatprep.subr.mxu0 0.0
    %803 = vmatpush1.msra.mxu0 0.0
    %804 = vmatprep.subr.mxu0 0.0
    %805 = vmatpush1.msra.mxu0 0.0
    %806 = vmatprep.subr.mxu0 0.0
    %807 = vmatpush1.msra.mxu0 0.0
    %808 = vmatprep.mubr.f32.mxu0 0.0
    %809 = vmatmul.mubr.f32.gmra.mrb[0].mxu0 %v504
    %v810 = vpop.f32.mrb[0].mxu0
    %v811 = vadd.f32 0.0, %v810
    %v812 = vpop.f32.mrb[0].mxu0
    %813 = vmatprep.mubr.f32.mxu0 0.0
    %814 = vmatmul.mubr.f32.gmra.mrb[0].mxu0 %v505
    %v815 = vpop.f32.mrb[0].mxu0
    %v816 = vadd.f32 0.0, %v815
    %v817 = vpop.f32.mrb[0].mxu0
    %818 = vmatprep.mubr.f32.mxu0 0.0
    %819 = vmatmul.mubr.f32.gmra.mrb[0].mxu0 %v506
    %v820 = vpop.f32.mrb[0].mxu0
    %v821 = vadd.f32 0.0, %v820
    %v822 = vpop.f32.mrb[0].mxu0
    %823 = vmatprep.mubr.f32.mxu0 0.0
    %824 = vmatmul.mubr.f32.gmra.mrb[0].mxu0 %v507
    %v825 = vpop.f32.mrb[0].mxu0
    %v826 = vadd.f32 0.0, %v825
    %v827 = vpop.f32.mrb[0].mxu0
    %828 = vmatprep.mubr.f32.mxu0 0.0
    %829 = vmatmul.mubr.f32.gmra.mrb[0].mxu0 %v508
    %v830 = vpop.f32.mrb[0].mxu0
    %v831 = vadd.f32 0.0, %v830
    %v832 = vpop.f32.mrb[0].mxu0
    %833 = vmatprep.mubr.f32.mxu0 0.0
    %834 = vmatmul.mubr.f32.gmra.mrb[0].mxu0 %v509
    %v835 = vpop.f32.mrb[0].mxu0
    %v836 = vadd.f32 0.0, %v835
    %v837 = vpop.f32.mrb[0].mxu0
    %838 = vmatprep.mubr.f32.mxu0 0.0
    %839 = vmatmul.mubr.f32.gmra.mrb[0].mxu0 %v510
    %v840 = vpop.f32.mrb[0].mxu0
    %v841 = vadd.f32 0.0, %v840
    %v842 = vpop.f32.mrb[0].mxu0
    %843 = vmatprep.mubr.f32.mxu0 0.0
    %844 = vmatmul.mubr.f32.gmra.mrb[0].mxu0 %v511
    %v845 = vpop.f32.mrb[0].mxu0
    %v846 = vadd.f32 0.0, %v845
    %v847 = vpop.f32.mrb[0].mxu0
    %848 = vmatprep.mubr.f32.mxu0 0.0
    %849 = vmatmul.mubr.f32.gmra.mrb[0].mxu0 %v512
    %v850 = vpop.f32.mrb[0].mxu0
    %v851 = vadd.f32 0.0, %v850
    %v852 = vpop.f32.mrb[0].mxu0
    %853 = vmatprep.mubr.f32.mxu0 0.0
    %854 = vmatmul.mubr.f32.gmra.mrb[0].mxu0 %v513
    %v855 = vpop.f32.mrb[0].mxu0
    %v856 = vadd.f32 0.0, %v855
    %v857 = vpop.f32.mrb[0].mxu0
    %858 = vmatprep.mubr.f32.mxu0 0.0
    %859 = vmatmul.mubr.f32.gmra.mrb[0].mxu0 %v514
    %v860 = vpop.f32.mrb[0].mxu0
    %v861 = vadd.f32 0.0, %v860
    %v862 = vpop.f32.mrb[0].mxu0
    %863 = vmatprep.mubr.f32.mxu0 0.0
    %864 = vmatmul.mubr.f32.gmra.mrb[0].mxu0 %v515
    %v865 = vpop.f32.mrb[0].mxu0
    %v866 = vadd.f32 0.0, %v865
    %v867 = vpop.f32.mrb[0].mxu0
    %868 = vmatprep.mubr.f32.mxu0 0.0
    %869 = vmatmul.mubr.f32.gmra.mrb[0].mxu0 %v516
    %v870 = vpop.f32.mrb[0].mxu0
    %v871 = vadd.f32 0.0, %v870
    %v872 = vpop.f32.mrb[0].mxu0
    %873 = vmatprep.mubr.f32.mxu0 0.0
    %874 = vmatmul.mubr.f32.gmra.mrb[0].mxu0 %v517
    %v875 = vpop.f32.mrb[0].mxu0
    %v876 = vadd.f32 0.0, %v875
    %v877 = vpop.f32.mrb[0].mxu0
    %878 = vmatprep.mubr.f32.mxu0 0.0
    %879 = vmatmul.mubr.f32.gmra.mrb[0].mxu0 %v518
    %v880 = vpop.f32.mrb[0].mxu0
    %v881 = vadd.f32 0.0, %v880
    %v882 = vpop.f32.mrb[0].mxu0
    %883 = vmatprep.mubr.f32.mxu0 0.0
    %884 = vmatmul.mubr.f32.gmra.mrb[0].mxu0 %v519
    %v885 = vpop.f32.mrb[0].mxu0
    %v886 = vadd.f32 0.0, %v885
    %v887 = vpop.f32.mrb[0].mxu0
    %888 = vmatprep.mubr.f32.mxu0 0.0
    %889 = vmatmul.mubr.f32.gmra.mrb[0].mxu0 %v536
    %v890 = vpop.f32.mrb[0].mxu0
    %v891 = vadd.f32 0.0, %v890
    %v892 = vpop.f32.mrb[0].mxu0
    %893 = vmatprep.mubr.f32.mxu0 0.0
    %894 = vmatmul.mubr.f32.gmra.mrb[0].mxu0 %v537
    %v895 = vpop.f32.mrb[0].mxu0
    %v896 = vadd.f32 0.0, %v895
    %v897 = vpop.f32.mrb[0].mxu0
    %898 = vmatprep.mubr.f32.mxu0 0.0
    %899 = vmatmul.mubr.f32.gmra.mrb[0].mxu0 %v538
    %v900 = vpop.f32.mrb[0].mxu0
    %v901 = vadd.f32 0.0, %v900
    %v902 = vpop.f32.mrb[0].mxu0
    %903 = vmatprep.mubr.f32.mxu0 0.0
    %904 = vmatmul.mubr.f32.gmra.mrb[0].mxu0 %v539
    %v905 = vpop.f32.mrb[0].mxu0
    %v906 = vadd.f32 0.0, %v905
    %v907 = vpop.f32.mrb[0].mxu0
    %908 = vmatprep.mubr.f32.mxu0 0.0
    %909 = vmatmul.mubr.f32.gmra.mrb[0].mxu0 %v540
    %v910 = vpop.f32.mrb[0].mxu0
    %v911 = vadd.f32 0.0, %v910
    %v912 = vpop.f32.mrb[0].mxu0
    %913 = vmatprep.mubr.f32.mxu0 0.0
    %914 = vmatmul.mubr.f32.gmra.mrb[0].mxu0 %v541
    %v915 = vpop.f32.mrb[0].mxu0
    %v916 = vadd.f32 0.0, %v915
    %v917 = vpop.f32.mrb[0].mxu0
    %918 = vmatprep.mubr.f32.mxu0 0.0
    %919 = vmatmul.mubr.f32.gmra.mrb[0].mxu0 %v542
    %v920 = vpop.f32.mrb[0].mxu0
    %v921 = vadd.f32 0.0, %v920
    %v922 = vpop.f32.mrb[0].mxu0
    %923 = vmatprep.mubr.f32.mxu0 0.0
    %924 = vmatmul.mubr.f32.gmra.mrb[0].mxu0 %v543
    %v925 = vpop.f32.mrb[0].mxu0
    %v926 = vadd.f32 0.0, %v925
    %v927 = vpop.f32.mrb[0].mxu0
    %928 = vmatprep.mubr.f32.mxu0 0.0
    %929 = vmatmul.mubr.f32.gmra.mrb[0].mxu0 %v544
    %v930 = vpop.f32.mrb[0].mxu0
    %v931 = vadd.f32 0.0, %v930
    %v932 = vpop.f32.mrb[0].mxu0
    %933 = vmatprep.mubr.f32.mxu0 0.0
    %934 = vmatmul.mubr.f32.gmra.mrb[0].mxu0 %v545
    %v935 = vpop.f32.mrb[0].mxu0
    %v936 = vadd.f32 0.0, %v935
    %v937 = vpop.f32.mrb[0].mxu0
    %938 = vmatprep.mubr.f32.mxu0 0.0
    %939 = vmatmul.mubr.f32.gmra.mrb[0].mxu0 %v546
    %v940 = vpop.f32.mrb[0].mxu0
    %v941 = vadd.f32 0.0, %v940
    %v942 = vpop.f32.mrb[0].mxu0
    %943 = vmatprep.mubr.f32.mxu0 0.0
    %944 = vmatmul.mubr.f32.gmra.mrb[0].mxu0 %v547
    %v945 = vpop.f32.mrb[0].mxu0
    %v946 = vadd.f32 0.0, %v945
    %v947 = vpop.f32.mrb[0].mxu0
    %948 = vmatprep.mubr.f32.mxu0 0.0
    %949 = vmatmul.mubr.f32.gmra.mrb[0].mxu0 %v548
    %v950 = vpop.f32.mrb[0].mxu0
    %v951 = vadd.f32 0.0, %v950
    %v952 = vpop.f32.mrb[0].mxu0
    %953 = vmatprep.mubr.f32.mxu0 0.0
    %954 = vmatmul.mubr.f32.gmra.mrb[0].mxu0 %v549
    %v955 = vpop.f32.mrb[0].mxu0
    %v956 = vadd.f32 0.0, %v955
    %v957 = vpop.f32.mrb[0].mxu0
    %958 = vmatprep.mubr.f32.mxu0 0.0
    %959 = vmatmul.mubr.f32.gmra.mrb[0].mxu0 %v550
    %v960 = vpop.f32.mrb[0].mxu0
    %v961 = vadd.f32 0.0, %v960
    %v962 = vpop.f32.mrb[0].mxu0
    %963 = vmatprep.mubr.f32.mxu0 0.0
    %964 = vmatmul.mubr.f32.gmra.mrb[0].mxu0 %v551
    %v965 = vpop.f32.mrb[0].mxu0
    %v966 = vadd.f32 0.0, %v965
    %v967 = vpop.f32.mrb[0].mxu0
    %968 = vmatprep.mubr.f32.mxu0 0.0
    %969 = vmatmul.mubr.f32.gmra.mrb[0].mxu0 %v568
    %v970 = vpop.f32.mrb[0].mxu0
    %v971 = vadd.f32 0.0, %v970
    %v972 = vpop.f32.mrb[0].mxu0
    %973 = vmatprep.mubr.f32.mxu0 0.0
    %974 = vmatmul.mubr.f32.gmra.mrb[0].mxu0 %v569
    %v975 = vpop.f32.mrb[0].mxu0
    %v976 = vadd.f32 0.0, %v975
    %v977 = vpop.f32.mrb[0].mxu0
    %978 = vmatprep.mubr.f32.mxu0 0.0
    %979 = vmatmul.mubr.f32.gmra.mrb[0].mxu0 %v570
    %v980 = vpop.f32.mrb[0].mxu0
    %v981 = vadd.f32 0.0, %v980
    %v982 = vpop.f32.mrb[0].mxu0
    %983 = vmatprep.mubr.f32.mxu0 0.0
    %984 = vmatmul.mubr.f32.gmra.mrb[0].mxu0 %v571
    %v985 = vpop.f32.mrb[0].mxu0
    %v986 = vadd.f32 0.0, %v985
    %v987 = vpop.f32.mrb[0].mxu0
    %988 = vmatprep.mubr.f32.mxu0 0.0
    %989 = vmatmul.mubr.f32.gmra.mrb[0].mxu0 %v572
    %v990 = vpop.f32.mrb[0].mxu0
    %v991 = vadd.f32 0.0, %v990
    %v992 = vpop.f32.mrb[0].mxu0
    %993 = vmatprep.mubr.f32.mxu0 0.0
    %994 = vmatmul.mubr.f32.gmra.mrb[0].mxu0 %v573
    %v995 = vpop.f32.mrb[0].mxu0
    %v996 = vadd.f32 0.0, %v995
    %v997 = vpop.f32.mrb[0].mxu0
    %998 = vmatprep.mubr.f32.mxu0 0.0
    %999 = vmatmul.mubr.f32.gmra.mrb[0].mxu0 %v574
    %v1000 = vpop.f32.mrb[0].mxu0
    %v1001 = vadd.f32 0.0, %v1000
    %v1002 = vpop.f32.mrb[0].mxu0
    %1003 = vmatprep.mubr.f32.mxu0 0.0
    %1004 = vmatmul.mubr.f32.gmra.mrb[0].mxu0 %v575
    %v1005 = vpop.f32.mrb[0].mxu0
    %v1006 = vadd.f32 0.0, %v1005
    %v1007 = vpop.f32.mrb[0].mxu0
    %1008 = vmatprep.mubr.f32.mxu0 0.0
    %1009 = vmatmul.mubr.f32.gmra.mrb[0].mxu0 %v576
    %v1010 = vpop.f32.mrb[0].mxu0
    %v1011 = vadd.f32 0.0, %v1010
    %v1012 = vpop.f32.mrb[0].mxu0
    %1013 = vmatprep.mubr.f32.mxu0 0.0
    %1014 = vmatmul.mubr.f32.gmra.mrb[0].mxu0 %v577
    %v1015 = vpop.f32.mrb[0].mxu0
    %v1016 = vadd.f32 0.0, %v1015
    %v1017 = vpop.f32.mrb[0].mxu0
    %1018 = vmatprep.mubr.f32.mxu0 0.0
    %1019 = vmatmul.mubr.f32.gmra.mrb[0].mxu0 %v578
    %v1020 = vpop.f32.mrb[0].mxu0
    %v1021 = vadd.f32 0.0, %v1020
    %v1022 = vpop.f32.mrb[0].mxu0
    %1023 = vmatprep.mubr.f32.mxu0 0.0
    %1024 = vmatmul.mubr.f32.gmra.mrb[0].mxu0 %v579
    %v1025 = vpop.f32.mrb[0].mxu0
    %v1026 = vadd.f32 0.0, %v1025
    %v1027 = vpop.f32.mrb[0].mxu0
    %1028 = vmatprep.mubr.f32.mxu0 0.0
    %1029 = vmatmul.mubr.f32.gmra.mrb[0].mxu0 %v580
    %v1030 = vpop.f32.mrb[0].mxu0
    %v1031 = vadd.f32 0.0, %v1030
    %v1032 = vpop.f32.mrb[0].mxu0
    %1033 = vmatprep.mubr.f32.mxu0 0.0
    %1034 = vmatmul.mubr.f32.gmra.mrb[0].mxu0 %v581
    %v1035 = vpop.f32.mrb[0].mxu0
    %v1036 = vadd.f32 0.0, %v1035
    %v1037 = vpop.f32.mrb[0].mxu0
    %1038 = vmatprep.mubr.f32.mxu0 0.0
    %1039 = vmatmul.mubr.f32.gmra.mrb[0].mxu0 %v582
    %v1040 = vpop.f32.mrb[0].mxu0
    %v1041 = vadd.f32 0.0, %v1040
    %v1042 = vpop.f32.mrb[0].mxu0
    %1043 = vmatprep.mubr.f32.mxu0 0.0
    %1044 = vmatmul.mubr.f32.gmra.mrb[0].mxu0 %v583
    %v1045 = vpop.f32.mrb[0].mxu0
    %v1046 = vadd.f32 0.0, %v1045
    %v1047 = vpop.f32.mrb[0].mxu0
    %1048 = vmatprep.mubr.f32.mxu0 0.0
    %1049 = vmatmul.mubr.f32.gmra.mrb[0].mxu0 %v600
    %v1050 = vpop.f32.mrb[0].mxu0
    %v1051 = vadd.f32 0.0, %v1050
    %v1052 = vpop.f32.mrb[0].mxu0
    %1053 = vmatprep.mubr.f32.mxu0 0.0
    %1054 = vmatmul.mubr.f32.gmra.mrb[0].mxu0 %v601
    %v1055 = vpop.f32.mrb[0].mxu0
    %v1056 = vadd.f32 0.0, %v1055
    %v1057 = vpop.f32.mrb[0].mxu0
    %1058 = vmatprep.mubr.f32.mxu0 0.0
    %1059 = vmatmul.mubr.f32.gmra.mrb[0].mxu0 %v602
    %v1060 = vpop.f32.mrb[0].mxu0
    %v1061 = vadd.f32 0.0, %v1060
    %v1062 = vpop.f32.mrb[0].mxu0
    %1063 = vmatprep.mubr.f32.mxu0 0.0
    %1064 = vmatmul.mubr.f32.gmra.mrb[0].mxu0 %v603
    %v1065 = vpop.f32.mrb[0].mxu0
    %v1066 = vadd.f32 0.0, %v1065
    %v1067 = vpop.f32.mrb[0].mxu0
    %1068 = vmatprep.mubr.f32.mxu0 0.0
    %1069 = vmatmul.mubr.f32.gmra.mrb[0].mxu0 %v604
    %v1070 = vpop.f32.mrb[0].mxu0
    %v1071 = vadd.f32 0.0, %v1070
    %v1072 = vpop.f32.mrb[0].mxu0
    %1073 = vmatprep.mubr.f32.mxu0 0.0
    %1074 = vmatmul.mubr.f32.gmra.mrb[0].mxu0 %v605
    %v1075 = vpop.f32.mrb[0].mxu0
    %v1076 = vadd.f32 0.0, %v1075
    %v1077 = vpop.f32.mrb[0].mxu0
    %1078 = vmatprep.mubr.f32.mxu0 0.0
    %1079 = vmatmul.mubr.f32.gmra.mrb[0].mxu0 %v606
    %v1080 = vpop.f32.mrb[0].mxu0
    %v1081 = vadd.f32 0.0, %v1080
    %v1082 = vpop.f32.mrb[0].mxu0
    %1083 = vmatprep.mubr.f32.mxu0 0.0
    %1084 = vmatmul.mubr.f32.gmra.mrb[0].mxu0 %v607
    %v1085 = vpop.f32.mrb[0].mxu0
    %v1086 = vadd.f32 0.0, %v1085
    %v1087 = vpop.f32.mrb[0].mxu0
    %1088 = vmatprep.mubr.f32.mxu0 0.0
    %1089 = vmatmul.mubr.f32.gmra.mrb[0].mxu0 %v608
    %v1090 = vpop.f32.mrb[0].mxu0
    %v1091 = vadd.f32 0.0, %v1090
    %v1092 = vpop.f32.mrb[0].mxu0
    %1093 = vmatprep.mubr.f32.mxu0 0.0
    %1094 = vmatmul.mubr.f32.gmra.mrb[0].mxu0 %v609
    %v1095 = vpop.f32.mrb[0].mxu0
    %v1096 = vadd.f32 0.0, %v1095
    %v1097 = vpop.f32.mrb[0].mxu0
    %1098 = vmatprep.mubr.f32.mxu0 0.0
    %1099 = vmatmul.mubr.f32.gmra.mrb[0].mxu0 %v610
    %v1100 = vpop.f32.mrb[0].mxu0
    %v1101 = vadd.f32 0.0, %v1100
    %v1102 = vpop.f32.mrb[0].mxu0
    %1103 = vmatprep.mubr.f32.mxu0 0.0
    %1104 = vmatmul.mubr.f32.gmra.mrb[0].mxu0 %v611
    %v1105 = vpop.f32.mrb[0].mxu0
    %v1106 = vadd.f32 0.0, %v1105
    %v1107 = vpop.f32.mrb[0].mxu0
    %1108 = vmatprep.mubr.f32.mxu0 0.0
    %1109 = vmatmul.mubr.f32.gmra.mrb[0].mxu0 %v612
    %v1110 = vpop.f32.mrb[0].mxu0
    %v1111 = vadd.f32 0.0, %v1110
    %v1112 = vpop.f32.mrb[0].mxu0
    %1113 = vmatprep.mubr.f32.mxu0 0.0
    %1114 = vmatmul.mubr.f32.gmra.mrb[0].mxu0 %v613
    %v1115 = vpop.f32.mrb[0].mxu0
    %v1116 = vadd.f32 0.0, %v1115
    %v1117 = vpop.f32.mrb[0].mxu0
    %1118 = vmatprep.mubr.f32.mxu0 0.0
    %1119 = vmatmul.mubr.f32.gmra.mrb[0].mxu0 %v614
    %v1120 = vpop.f32.mrb[0].mxu0
    %v1121 = vadd.f32 0.0, %v1120
    %v1122 = vpop.f32.mrb[0].mxu0
    %1123 = vmatprep.mubr.f32.mxu0 0.0
    %1124 = vmatmul.mubr.f32.gmra.mrb[0].mxu0 %v615
    %v1125 = vpop.f32.mrb[0].mxu0
    %v1126 = vadd.f32 0.0, %v1125
    %v1127 = vpop.f32.mrb[0].mxu0
    %1128 = vmatprep.mubr.f32.mxu0 0.0
    %1129 = vmatmul.mubr.f32.gmra.mrb[0].mxu0 %v632
    %v1130 = vpop.f32.mrb[0].mxu0
    %v1131 = vadd.f32 0.0, %v1130
    %v1132 = vpop.f32.mrb[0].mxu0
    %1133 = vmatprep.mubr.f32.mxu0 0.0
    %1134 = vmatmul.mubr.f32.gmra.mrb[0].mxu0 %v633
    %v1135 = vpop.f32.mrb[0].mxu0
    %v1136 = vadd.f32 0.0, %v1135
    %v1137 = vpop.f32.mrb[0].mxu0
    %1138 = vmatprep.mubr.f32.mxu0 0.0
    %1139 = vmatmul.mubr.f32.gmra.mrb[0].mxu0 %v634
    %v1140 = vpop.f32.mrb[0].mxu0
    %v1141 = vadd.f32 0.0, %v1140
    %v1142 = vpop.f32.mrb[0].mxu0
    %1143 = vmatprep.mubr.f32.mxu0 0.0
    %1144 = vmatmul.mubr.f32.gmra.mrb[0].mxu0 %v635
    %v1145 = vpop.f32.mrb[0].mxu0
    %v1146 = vadd.f32 0.0, %v1145
    %v1147 = vpop.f32.mrb[0].mxu0
    %1148 = vmatprep.mubr.f32.mxu0 0.0
    %1149 = vmatmul.mubr.f32.gmra.mrb[0].mxu0 %v636
    %v1150 = vpop.f32.mrb[0].mxu0
    %v1151 = vadd.f32 0.0, %v1150
    %v1152 = vpop.f32.mrb[0].mxu0
    %1153 = vmatprep.mubr.f32.mxu0 0.0
    %1154 = vmatmul.mubr.f32.gmra.mrb[0].mxu0 %v637
    %v1155 = vpop.f32.mrb[0].mxu0
    %v1156 = vadd.f32 0.0, %v1155
    %v1157 = vpop.f32.mrb[0].mxu0
    %1158 = vmatprep.mubr.f32.mxu0 0.0
    %1159 = vmatmul.mubr.f32.gmra.mrb[0].mxu0 %v638
    %v1160 = vpop.f32.mrb[0].mxu0
    %v1161 = vadd.f32 0.0, %v1160
    %v1162 = vpop.f32.mrb[0].mxu0
    %1163 = vmatprep.mubr.f32.mxu0 0.0
    %1164 = vmatmul.mubr.f32.gmra.mrb[0].mxu0 %v639
    %v1165 = vpop.f32.mrb[0].mxu0
    %v1166 = vadd.f32 0.0, %v1165
    %v1167 = vpop.f32.mrb[0].mxu0
    %1168 = vmatprep.mubr.f32.mxu0 0.0
    %1169 = vmatmul.mubr.f32.gmra.mrb[0].mxu0 %v640
    %v1170 = vpop.f32.mrb[0].mxu0
    %v1171 = vadd.f32 0.0, %v1170
    %v1172 = vpop.f32.mrb[0].mxu0
    %1173 = vmatprep.mubr.f32.mxu0 0.0
    %1174 = vmatmul.mubr.f32.gmra.mrb[0].mxu0 %v641
    %v1175 = vpop.f32.mrb[0].mxu0
    %v1176 = vadd.f32 0.0, %v1175
    %v1177 = vpop.f32.mrb[0].mxu0
    %1178 = vmatprep.mubr.f32.mxu0 0.0
    %1179 = vmatmul.mubr.f32.gmra.mrb[0].mxu0 %v642
    %v1180 = vpop.f32.mrb[0].mxu0
    %v1181 = vadd.f32 0.0, %v1180
    %v1182 = vpop.f32.mrb[0].mxu0
    %1183 = vmatprep.mubr.f32.mxu0 0.0
    %1184 = vmatmul.mubr.f32.gmra.mrb[0].mxu0 %v643
    %v1185 = vpop.f32.mrb[0].mxu0
    %v1186 = vadd.f32 0.0, %v1185
    %v1187 = vpop.f32.mrb[0].mxu0
    %1188 = vmatprep.mubr.f32.mxu0 0.0
    %1189 = vmatmul.mubr.f32.gmra.mrb[0].mxu0 %v644
    %v1190 = vpop.f32.mrb[0].mxu0
    %v1191 = vadd.f32 0.0, %v1190
    %v1192 = vpop.f32.mrb[0].mxu0
    %1193 = vmatprep.mubr.f32.mxu0 0.0
    %1194 = vmatmul.mubr.f32.gmra.mrb[0].mxu0 %v645
    %v1195 = vpop.f32.mrb[0].mxu0
    %v1196 = vadd.f32 0.0, %v1195
    %v1197 = vpop.f32.mrb[0].mxu0
    %1198 = vmatprep.mubr.f32.mxu0 0.0
    %1199 = vmatmul.mubr.f32.gmra.mrb[0].mxu0 %v646
    %v1200 = vpop.f32.mrb[0].mxu0
    %v1201 = vadd.f32 0.0, %v1200
    %v1202 = vpop.f32.mrb[0].mxu0
    %1203 = vmatprep.mubr.f32.mxu0 0.0
    %1204 = vmatmul.mubr.f32.gmra.mrb[0].mxu0 %v647
    %v1205 = vpop.f32.mrb[0].mxu0
    %v1206 = vadd.f32 0.0, %v1205
    %v1207 = vpop.f32.mrb[0].mxu0
    %1208 = vmatprep.mubr.f32.mxu0 0.0
    %1209 = vmatmul.mubr.f32.gmra.mrb[0].mxu0 %v664
    %v1210 = vpop.f32.mrb[0].mxu0
    %v1211 = vadd.f32 0.0, %v1210
    %v1212 = vpop.f32.mrb[0].mxu0
    %1213 = vmatprep.mubr.f32.mxu0 0.0
    %1214 = vmatmul.mubr.f32.gmra.mrb[0].mxu0 %v665
    %v1215 = vpop.f32.mrb[0].mxu0
    %v1216 = vadd.f32 0.0, %v1215
    %v1217 = vpop.f32.mrb[0].mxu0
    %1218 = vmatprep.mubr.f32.mxu0 0.0
    %1219 = vmatmul.mubr.f32.gmra.mrb[0].mxu0 %v666
    %v1220 = vpop.f32.mrb[0].mxu0
    %v1221 = vadd.f32 0.0, %v1220
    %v1222 = vpop.f32.mrb[0].mxu0
    %1223 = vmatprep.mubr.f32.mxu0 0.0
    %1224 = vmatmul.mubr.f32.gmra.mrb[0].mxu0 %v667
    %v1225 = vpop.f32.mrb[0].mxu0
    %v1226 = vadd.f32 0.0, %v1225
    %v1227 = vpop.f32.mrb[0].mxu0
    %1228 = vmatprep.mubr.f32.mxu0 0.0
    %1229 = vmatmul.mubr.f32.gmra.mrb[0].mxu0 %v668
    %v1230 = vpop.f32.mrb[0].mxu0
    %v1231 = vadd.f32 0.0, %v1230
    %v1232 = vpop.f32.mrb[0].mxu0
    %1233 = vmatprep.mubr.f32.mxu0 0.0
    %1234 = vmatmul.mubr.f32.gmra.mrb[0].mxu0 %v669
    %v1235 = vpop.f32.mrb[0].mxu0
    %v1236 = vadd.f32 0.0, %v1235
    %v1237 = vpop.f32.mrb[0].mxu0
    %1238 = vmatprep.mubr.f32.mxu0 0.0
    %1239 = vmatmul.mubr.f32.gmra.mrb[0].mxu0 %v670
    %v1240 = vpop.f32.mrb[0].mxu0
    %v1241 = vadd.f32 0.0, %v1240
    %v1242 = vpop.f32.mrb[0].mxu0
    %1243 = vmatprep.mubr.f32.mxu0 0.0
    %1244 = vmatmul.mubr.f32.gmra.mrb[0].mxu0 %v671
    %v1245 = vpop.f32.mrb[0].mxu0
    %v1246 = vadd.f32 0.0, %v1245
    %v1247 = vpop.f32.mrb[0].mxu0
    %1248 = vmatprep.mubr.f32.mxu0 0.0
    %1249 = vmatmul.mubr.f32.gmra.mrb[0].mxu0 %v672
    %v1250 = vpop.f32.mrb[0].mxu0
    %v1251 = vadd.f32 0.0, %v1250
    %v1252 = vpop.f32.mrb[0].mxu0
    %1253 = vmatprep.mubr.f32.mxu0 0.0
    %1254 = vmatmul.mubr.f32.gmra.mrb[0].mxu0 %v673
    %v1255 = vpop.f32.mrb[0].mxu0
    %v1256 = vadd.f32 0.0, %v1255
    %v1257 = vpop.f32.mrb[0].mxu0
    %1258 = vmatprep.mubr.f32.mxu0 0.0
    %1259 = vmatmul.mubr.f32.gmra.mrb[0].mxu0 %v674
    %v1260 = vpop.f32.mrb[0].mxu0
    %v1261 = vadd.f32 0.0, %v1260
    %v1262 = vpop.f32.mrb[0].mxu0
    %1263 = vmatprep.mubr.f32.mxu0 0.0
    %1264 = vmatmul.mubr.f32.gmra.mrb[0].mxu0 %v675
    %v1265 = vpop.f32.mrb[0].mxu0
    %v1266 = vadd.f32 0.0, %v1265
    %v1267 = vpop.f32.mrb[0].mxu0
    %1268 = vmatprep.mubr.f32.mxu0 0.0
    %1269 = vmatmul.mubr.f32.gmra.mrb[0].mxu0 %v676
    %v1270 = vpop.f32.mrb[0].mxu0
    %v1271 = vadd.f32 0.0, %v1270
    %v1272 = vpop.f32.mrb[0].mxu0
    %1273 = vmatprep.mubr.f32.mxu0 0.0
    %1274 = vmatmul.mubr.f32.gmra.mrb[0].mxu0 %v677
    %v1275 = vpop.f32.mrb[0].mxu0
    %v1276 = vadd.f32 0.0, %v1275
    %v1277 = vpop.f32.mrb[0].mxu0
    %1278 = vmatprep.mubr.f32.mxu0 0.0
    %1279 = vmatmul.mubr.f32.gmra.mrb[0].mxu0 %v678
    %v1280 = vpop.f32.mrb[0].mxu0
    %v1281 = vadd.f32 0.0, %v1280
    %v1282 = vpop.f32.mrb[0].mxu0
    %1283 = vmatprep.mubr.f32.mxu0 0.0
    %1284 = vmatmul.mubr.f32.gmra.mrb[0].mxu0 %v679
    %v1285 = vpop.f32.mrb[0].mxu0
    %v1286 = vadd.f32 0.0, %v1285
    %v1287 = vpop.f32.mrb[0].mxu0
    %1288 = vmatprep.mubr.f32.mxu0 0.0
    %1289 = vmatmul.mubr.f32.gmra.mrb[0].mxu0 %v696
    %v1290 = vpop.f32.mrb[0].mxu0
    %v1291 = vadd.f32 0.0, %v1290
    %v1292 = vpop.f32.mrb[0].mxu0
    %1293 = vmatprep.mubr.f32.mxu0 0.0
    %1294 = vmatmul.mubr.f32.gmra.mrb[0].mxu0 %v697
    %v1295 = vpop.f32.mrb[0].mxu0
    %v1296 = vadd.f32 0.0, %v1295
    %v1297 = vpop.f32.mrb[0].mxu0
    %1298 = vmatprep.mubr.f32.mxu0 0.0
    %1299 = vmatmul.mubr.f32.gmra.mrb[0].mxu0 %v698
    %v1300 = vpop.f32.mrb[0].mxu0
    %v1301 = vadd.f32 0.0, %v1300
    %v1302 = vpop.f32.mrb[0].mxu0
    %1303 = vmatprep.mubr.f32.mxu0 0.0
    %1304 = vmatmul.mubr.f32.gmra.mrb[0].mxu0 %v699
    %v1305 = vpop.f32.mrb[0].mxu0
    %v1306 = vadd.f32 0.0, %v1305
    %v1307 = vpop.f32.mrb[0].mxu0
    %1308 = vmatprep.mubr.f32.mxu0 0.0
    %1309 = vmatmul.mubr.f32.gmra.mrb[0].mxu0 %v700
    %v1310 = vpop.f32.mrb[0].mxu0
    %v1311 = vadd.f32 0.0, %v1310
    %v1312 = vpop.f32.mrb[0].mxu0
    %1313 = vmatprep.mubr.f32.mxu0 0.0
    %1314 = vmatmul.mubr.f32.gmra.mrb[0].mxu0 %v701
    %v1315 = vpop.f32.mrb[0].mxu0
    %v1316 = vadd.f32 0.0, %v1315
    %v1317 = vpop.f32.mrb[0].mxu0
    %1318 = vmatprep.mubr.f32.mxu0 0.0
    %1319 = vmatmul.mubr.f32.gmra.mrb[0].mxu0 %v702
    %v1320 = vpop.f32.mrb[0].mxu0
    %v1321 = vadd.f32 0.0, %v1320
    %v1322 = vpop.f32.mrb[0].mxu0
    %1323 = vmatprep.mubr.f32.mxu0 0.0
    %1324 = vmatmul.mubr.f32.gmra.mrb[0].mxu0 %v703
    %v1325 = vpop.f32.mrb[0].mxu0
    %v1326 = vadd.f32 0.0, %v1325
    %v1327 = vpop.f32.mrb[0].mxu0
    %1328 = vmatprep.mubr.f32.mxu0 0.0
    %1329 = vmatmul.mubr.f32.gmra.mrb[0].mxu0 %v704
    %v1330 = vpop.f32.mrb[0].mxu0
    %v1331 = vadd.f32 0.0, %v1330
    %v1332 = vpop.f32.mrb[0].mxu0
    %1333 = vmatprep.mubr.f32.mxu0 0.0
    %1334 = vmatmul.mubr.f32.gmra.mrb[0].mxu0 %v705
    %v1335 = vpop.f32.mrb[0].mxu0
    %v1336 = vadd.f32 0.0, %v1335
    %v1337 = vpop.f32.mrb[0].mxu0
    %1338 = vmatprep.mubr.f32.mxu0 0.0
    %1339 = vmatmul.mubr.f32.gmra.mrb[0].mxu0 %v706
    %v1340 = vpop.f32.mrb[0].mxu0
    %v1341 = vadd.f32 0.0, %v1340
    %v1342 = vpop.f32.mrb[0].mxu0
    %1343 = vmatprep.mubr.f32.mxu0 0.0
    %1344 = vmatmul.mubr.f32.gmra.mrb[0].mxu0 %v707
    %v1345 = vpop.f32.mrb[0].mxu0
    %v1346 = vadd.f32 0.0, %v1345
    %v1347 = vpop.f32.mrb[0].mxu0
    %1348 = vmatprep.mubr.f32.mxu0 0.0
    %1349 = vmatmul.mubr.f32.gmra.mrb[0].mxu0 %v708
    %v1350 = vpop.f32.mrb[0].mxu0
    %v1351 = vadd.f32 0.0, %v1350
    %v1352 = vpop.f32.mrb[0].mxu0
    %1353 = vmatprep.mubr.f32.mxu0 0.0
    %1354 = vmatmul.mubr.f32.gmra.mrb[0].mxu0 %v709
    %v1355 = vpop.f32.mrb[0].mxu0
    %v1356 = vadd.f32 0.0, %v1355
    %v1357 = vpop.f32.mrb[0].mxu0
    %1358 = vmatprep.mubr.f32.mxu0 0.0
    %1359 = vmatmul.mubr.f32.gmra.mrb[0].mxu0 %v710
    %v1360 = vpop.f32.mrb[0].mxu0
    %v1361 = vadd.f32 0.0, %v1360
    %v1362 = vpop.f32.mrb[0].mxu0
    %1363 = vmatprep.mubr.f32.mxu0 0.0
    %1364 = vmatmul.mubr.f32.gmra.mrb[0].mxu0 %v711
    %v1365 = vpop.f32.mrb[0].mxu0
    %v1366 = vadd.f32 0.0, %v1365
    %v1367 = vpop.f32.mrb[0].mxu0
    %1368 = vmatprep.mubr.f32.mxu0 0.0
    %1369 = vmatmul.mubr.f32.gmra.mrb[0].mxu0 %v728
    %v1370 = vpop.f32.mrb[0].mxu0
    %v1371 = vadd.f32 0.0, %v1370
    %v1372 = vpop.f32.mrb[0].mxu0
    %1373 = vmatprep.mubr.f32.mxu0 0.0
    %1374 = vmatmul.mubr.f32.gmra.mrb[0].mxu0 %v729
    %v1375 = vpop.f32.mrb[0].mxu0
    %v1376 = vadd.f32 0.0, %v1375
    %v1377 = vpop.f32.mrb[0].mxu0
    %1378 = vmatprep.mubr.f32.mxu0 0.0
    %1379 = vmatmul.mubr.f32.gmra.mrb[0].mxu0 %v730
    %v1380 = vpop.f32.mrb[0].mxu0
    %v1381 = vadd.f32 0.0, %v1380
    %v1382 = vpop.f32.mrb[0].mxu0
    %1383 = vmatprep.mubr.f32.mxu0 0.0
    %1384 = vmatmul.mubr.f32.gmra.mrb[0].mxu0 %v731
    %v1385 = vpop.f32.mrb[0].mxu0
    %v1386 = vadd.f32 0.0, %v1385
    %v1387 = vpop.f32.mrb[0].mxu0
    %1388 = vmatprep.mubr.f32.mxu0 0.0
    %1389 = vmatmul.mubr.f32.gmra.mrb[0].mxu0 %v732
    %v1390 = vpop.f32.mrb[0].mxu0
    %v1391 = vadd.f32 0.0, %v1390
    %v1392 = vpop.f32.mrb[0].mxu0
    %1393 = vmatprep.mubr.f32.mxu0 0.0
    %1394 = vmatmul.mubr.f32.gmra.mrb[0].mxu0 %v733
    %v1395 = vpop.f32.mrb[0].mxu0
    %v1396 = vadd.f32 0.0, %v1395
    %v1397 = vpop.f32.mrb[0].mxu0
    %1398 = vmatprep.mubr.f32.mxu0 0.0
    %1399 = vmatmul.mubr.f32.gmra.mrb[0].mxu0 %v734
    %v1400 = vpop.f32.mrb[0].mxu0
    %v1401 = vadd.f32 0.0, %v1400
    %v1402 = vpop.f32.mrb[0].mxu0
    %1403 = vmatprep.mubr.f32.mxu0 0.0
    %1404 = vmatmul.mubr.f32.gmra.mrb[0].mxu0 %v735
    %v1405 = vpop.f32.mrb[0].mxu0
    %v1406 = vadd.f32 0.0, %v1405
    %v1407 = vpop.f32.mrb[0].mxu0
    %1408 = vmatprep.mubr.f32.mxu0 0.0
    %1409 = vmatmul.mubr.f32.gmra.mrb[0].mxu0 %v736
    %v1410 = vpop.f32.mrb[0].mxu0
    %v1411 = vadd.f32 0.0, %v1410
    %v1412 = vpop.f32.mrb[0].mxu0
    %1413 = vmatprep.mubr.f32.mxu0 0.0
    %1414 = vmatmul.mubr.f32.gmra.mrb[0].mxu0 %v737
    %v1415 = vpop.f32.mrb[0].mxu0
    %v1416 = vadd.f32 0.0, %v1415
    %v1417 = vpop.f32.mrb[0].mxu0
    %1418 = vmatprep.mubr.f32.mxu0 0.0
    %1419 = vmatmul.mubr.f32.gmra.mrb[0].mxu0 %v738
    %v1420 = vpop.f32.mrb[0].mxu0
    %v1421 = vadd.f32 0.0, %v1420
    %v1422 = vpop.f32.mrb[0].mxu0
    %1423 = vmatprep.mubr.f32.mxu0 0.0
    %1424 = vmatmul.mubr.f32.gmra.mrb[0].mxu0 %v739
    %v1425 = vpop.f32.mrb[0].mxu0
    %v1426 = vadd.f32 0.0, %v1425
    %v1427 = vpop.f32.mrb[0].mxu0
    %1428 = vmatprep.mubr.f32.mxu0 0.0
    %1429 = vmatmul.mubr.f32.gmra.mrb[0].mxu0 %v740
    %v1430 = vpop.f32.mrb[0].mxu0
    %v1431 = vadd.f32 0.0, %v1430
    %v1432 = vpop.f32.mrb[0].mxu0
    %1433 = vmatprep.mubr.f32.mxu0 0.0
    %1434 = vmatmul.mubr.f32.gmra.mrb[0].mxu0 %v741
    %v1435 = vpop.f32.mrb[0].mxu0
    %v1436 = vadd.f32 0.0, %v1435
    %v1437 = vpop.f32.mrb[0].mxu0
    %1438 = vmatprep.mubr.f32.mxu0 0.0
    %1439 = vmatmul.mubr.f32.gmra.mrb[0].mxu0 %v742
    %v1440 = vpop.f32.mrb[0].mxu0
    %v1441 = vadd.f32 0.0, %v1440
    %v1442 = vpop.f32.mrb[0].mxu0
    %1443 = vmatprep.mubr.f32.mxu0 0.0
    %1444 = vmatmul.mubr.f32.gmra.mrb[0].mxu0 %v743
    %v1445 = vpop.f32.mrb[0].mxu0
    %v1446 = vadd.f32 0.0, %v1445
    %v1447 = vpop.f32.mrb[0].mxu0
    %1448 = vdwg.mxu0
    %1449 = vst [vmem:[#allocation7] sm:$0xff] %v811
    %1450 = vst [vmem:[#allocation7 + $0x8] sm:$0xff] %v816
    %1451 = vst [vmem:[#allocation7 + $0x10] sm:$0xff] %v821
    %1452 = vst [vmem:[#allocation7 + $0x18] sm:$0xff] %v826
    %1453 = vst [vmem:[#allocation7 + $0x20] sm:$0xff] %v831
    %1454 = vst [vmem:[#allocation7 + $0x28] sm:$0xff] %v836
    %1455 = vst [vmem:[#allocation7 + $0x30] sm:$0xff] %v841
    %1456 = vst [vmem:[#allocation7 + $0x38] sm:$0xff] %v846
    %1457 = vst [vmem:[#allocation7 + $0x40] sm:$0xff] %v851
    %1458 = vst [vmem:[#allocation7 + $0x48] sm:$0xff] %v856
    %1459 = vst [vmem:[#allocation7 + $0x50] sm:$0xff] %v861
    %1460 = vst [vmem:[#allocation7 + $0x58] sm:$0xff] %v866
    %1461 = vst [vmem:[#allocation7 + $0x60] sm:$0xff] %v871
    %1462 = vst [vmem:[#allocation7 + $0x68] sm:$0xff] %v876
    %1463 = vst [vmem:[#allocation7 + $0x70] sm:$0xff] %v881
    %1464 = vst [vmem:[#allocation7 + $0x78] sm:$0xff] %v886
    %1465 = vst [vmem:[#allocation7 + $0x80] sm:$0xff] %v891
    %1466 = vst [vmem:[#allocation7 + $0x88] sm:$0xff] %v896
    %1467 = vst [vmem:[#allocation7 + $0x90] sm:$0xff] %v901
    %1468 = vst [vmem:[#allocation7 + $0x98] sm:$0xff] %v906
    %1469 = vst [vmem:[#allocation7 + $0xa0] sm:$0xff] %v911
    %1470 = vst [vmem:[#allocation7 + $0xa8] sm:$0xff] %v916
    %1471 = vst [vmem:[#allocation7 + $0xb0] sm:$0xff] %v921
    %1472 = vst [vmem:[#allocation7 + $0xb8] sm:$0xff] %v926
    %1473 = vst [vmem:[#allocation7 + $0xc0] sm:$0xff] %v931
    %1474 = vst [vmem:[#allocation7 + $0xc8] sm:$0xff] %v936
    %1475 = vst [vmem:[#allocation7 + $0xd0] sm:$0xff] %v941
    %1476 = vst [vmem:[#allocation7 + $0xd8] sm:$0xff] %v946
    %1477 = vst [vmem:[#allocation7 + $0xe0] sm:$0xff] %v951
    %1478 = vst [vmem:[#allocation7 + $0xe8] sm:$0xff] %v956
    %1479 = vst [vmem:[#allocation7 + $0xf0] sm:$0xff] %v961
    %1480 = vst [vmem:[#allocation7 + $0xf8] sm:$0xff] %v966
    %1481 = vst [vmem:[#allocation7 + $0x100] sm:$0xff] %v971
    %1482 = vst [vmem:[#allocation7 + $0x108] sm:$0xff] %v976
    %1483 = vst [vmem:[#allocation7 + $0x110] sm:$0xff] %v981
    %1484 = vst [vmem:[#allocation7 + $0x118] sm:$0xff] %v986
    %1485 = vst [vmem:[#allocation7 + $0x120] sm:$0xff] %v991
    %1486 = vst [vmem:[#allocation7 + $0x128] sm:$0xff] %v996
    %1487 = vst [vmem:[#allocation7 + $0x130] sm:$0xff] %v1001
    %1488 = vst [vmem:[#allocation7 + $0x138] sm:$0xff] %v1006
    %1489 = vst [vmem:[#allocation7 + $0x140] sm:$0xff] %v1011
    %1490 = vst [vmem:[#allocation7 + $0x148] sm:$0xff] %v1016
    %1491 = vst [vmem:[#allocation7 + $0x150] sm:$0xff] %v1021
    %1492 = vst [vmem:[#allocation7 + $0x158] sm:$0xff] %v1026
    %1493 = vst [vmem:[#allocation7 + $0x160] sm:$0xff] %v1031
    %1494 = vst [vmem:[#allocation7 + $0x168] sm:$0xff] %v1036
    %1495 = vst [vmem:[#allocation7 + $0x170] sm:$0xff] %v1041
    %1496 = vst [vmem:[#allocation7 + $0x178] sm:$0xff] %v1046
    %1497 = vst [vmem:[#allocation7 + $0x180] sm:$0xff] %v1051
    %1498 = vst [vmem:[#allocation7 + $0x188] sm:$0xff] %v1056
    %1499 = vst [vmem:[#allocation7 + $0x190] sm:$0xff] %v1061
    %1500 = vst [vmem:[#allocation7 + $0x198] sm:$0xff] %v1066
    %1501 = vst [vmem:[#allocation7 + $0x1a0] sm:$0xff] %v1071
    %1502 = vst [vmem:[#allocation7 + $0x1a8] sm:$0xff] %v1076
    %1503 = vst [vmem:[#allocation7 + $0x1b0] sm:$0xff] %v1081
    %1504 = vst [vmem:[#allocation7 + $0x1b8] sm:$0xff] %v1086
    %1505 = vst [vmem:[#allocation7 + $0x1c0] sm:$0xff] %v1091
    %1506 = vst [vmem:[#allocation7 + $0x1c8] sm:$0xff] %v1096
    %1507 = vst [vmem:[#allocation7 + $0x1d0] sm:$0xff] %v1101
    %1508 = vst [vmem:[#allocation7 + $0x1d8] sm:$0xff] %v1106
    %1509 = vst [vmem:[#allocation7 + $0x1e0] sm:$0xff] %v1111
    %1510 = vst [vmem:[#allocation7 + $0x1e8] sm:$0xff] %v1116
    %1511 = vst [vmem:[#allocation7 + $0x1f0] sm:$0xff] %v1121
    %1512 = vst [vmem:[#allocation7 + $0x1f8] sm:$0xff] %v1126
    %1513 = vst [vmem:[#allocation7 + $0x200] sm:$0xff] %v1131
    %1514 = vst [vmem:[#allocation7 + $0x208] sm:$0xff] %v1136
    %1515 = vst [vmem:[#allocation7 + $0x210] sm:$0xff] %v1141
    %1516 = vst [vmem:[#allocation7 + $0x218] sm:$0xff] %v1146
    %1517 = vst [vmem:[#allocation7 + $0x220] sm:$0xff] %v1151
    %1518 = vst [vmem:[#allocation7 + $0x228] sm:$0xff] %v1156
    %1519 = vst [vmem:[#allocation7 + $0x230] sm:$0xff] %v1161
    %1520 = vst [vmem:[#allocation7 + $0x238] sm:$0xff] %v1166
    %1521 = vst [vmem:[#allocation7 + $0x240] sm:$0xff] %v1171
    %1522 = vst [vmem:[#allocation7 + $0x248] sm:$0xff] %v1176
    %1523 = vst [vmem:[#allocation7 + $0x250] sm:$0xff] %v1181
    %1524 = vst [vmem:[#allocation7 + $0x258] sm:$0xff] %v1186
    %1525 = vst [vmem:[#allocation7 + $0x260] sm:$0xff] %v1191
    %1526 = vst [vmem:[#allocation7 + $0x268] sm:$0xff] %v1196
    %1527 = vst [vmem:[#allocation7 + $0x270] sm:$0xff] %v1201
    %1528 = vst [vmem:[#allocation7 + $0x278] sm:$0xff] %v1206
    %1529 = vst [vmem:[#allocation7 + $0x280] sm:$0xff] %v1211
    %1530 = vst [vmem:[#allocation7 + $0x288] sm:$0xff] %v1216
    %1531 = vst [vmem:[#allocation7 + $0x290] sm:$0xff] %v1221
    %1532 = vst [vmem:[#allocation7 + $0x298] sm:$0xff] %v1226
    %1533 = vst [vmem:[#allocation7 + $0x2a0] sm:$0xff] %v1231
    %1534 = vst [vmem:[#allocation7 + $0x2a8] sm:$0xff] %v1236
    %1535 = vst [vmem:[#allocation7 + $0x2b0] sm:$0xff] %v1241
    %1536 = vst [vmem:[#allocation7 + $0x2b8] sm:$0xff] %v1246
    %1537 = vst [vmem:[#allocation7 + $0x2c0] sm:$0xff] %v1251
    %1538 = vst [vmem:[#allocation7 + $0x2c8] sm:$0xff] %v1256
    %1539 = vst [vmem:[#allocation7 + $0x2d0] sm:$0xff] %v1261
    %1540 = vst [vmem:[#allocation7 + $0x2d8] sm:$0xff] %v1266
    %1541 = vst [vmem:[#allocation7 + $0x2e0] sm:$0xff] %v1271
    %1542 = vst [vmem:[#allocation7 + $0x2e8] sm:$0xff] %v1276
    %1543 = vst [vmem:[#allocation7 + $0x2f0] sm:$0xff] %v1281
    %1544 = vst [vmem:[#allocation7 + $0x2f8] sm:$0xff] %v1286
    %1545 = vst [vmem:[#allocation7 + $0x300] sm:$0xff] %v1291
    %1546 = vst [vmem:[#allocation7 + $0x308] sm:$0xff] %v1296
    %1547 = vst [vmem:[#allocation7 + $0x310] sm:$0xff] %v1301
    %1548 = vst [vmem:[#allocation7 + $0x318] sm:$0xff] %v1306
    %1549 = vst [vmem:[#allocation7 + $0x320] sm:$0xff] %v1311
    %1550 = vst [vmem:[#allocation7 + $0x328] sm:$0xff] %v1316
    %1551 = vst [vmem:[#allocation7 + $0x330] sm:$0xff] %v1321
    %1552 = vst [vmem:[#allocation7 + $0x338] sm:$0xff] %v1326
    %1553 = vst [vmem:[#allocation7 + $0x340] sm:$0xff] %v1331
    %1554 = vst [vmem:[#allocation7 + $0x348] sm:$0xff] %v1336
    %1555 = vst [vmem:[#allocation7 + $0x350] sm:$0xff] %v1341
    %1556 = vst [vmem:[#allocation7 + $0x358] sm:$0xff] %v1346
    %1557 = vst [vmem:[#allocation7 + $0x360] sm:$0xff] %v1351
    %1558 = vst [vmem:[#allocation7 + $0x368] sm:$0xff] %v1356
    %1559 = vst [vmem:[#allocation7 + $0x370] sm:$0xff] %v1361
    %1560 = vst [vmem:[#allocation7 + $0x378] sm:$0xff] %v1366
    %1561 = vst [vmem:[#allocation7 + $0x380] sm:$0xff] %v1371
    %1562 = vst [vmem:[#allocation7 + $0x388] sm:$0xff] %v1376
    %1563 = vst [vmem:[#allocation7 + $0x390] sm:$0xff] %v1381
    %1564 = vst [vmem:[#allocation7 + $0x398] sm:$0xff] %v1386
    %1565 = vst [vmem:[#allocation7 + $0x3a0] sm:$0xff] %v1391
    %1566 = vst [vmem:[#allocation7 + $0x3a8] sm:$0xff] %v1396
    %1567 = vst [vmem:[#allocation7 + $0x3b0] sm:$0xff] %v1401
    %1568 = vst [vmem:[#allocation7 + $0x3b8] sm:$0xff] %v1406
    %1569 = vst [vmem:[#allocation7 + $0x3c0] sm:$0xff] %v1411
    %1570 = vst [vmem:[#allocation7 + $0x3c8] sm:$0xff] %v1416
    %1571 = vst [vmem:[#allocation7 + $0x3d0] sm:$0xff] %v1421
    %1572 = vst [vmem:[#allocation7 + $0x3d8] sm:$0xff] %v1426
    %1573 = vst [vmem:[#allocation7 + $0x3e0] sm:$0xff] %v1431
    %1574 = vst [vmem:[#allocation7 + $0x3e8] sm:$0xff] %v1436
    %1575 = vst [vmem:[#allocation7 + $0x3f0] sm:$0xff] %v1441
    %1576 = vst [vmem:[#allocation7 + $0x3f8] sm:$0xff] %v1446
    // Predicated region
    $region18: #{tpu_custom_call.1} parent=1 // pred_check
      _
    $region19: #{tpu_custom_call.1} parent=1 // pred_check_branch
      %1578 = sbr.rel (0) target = $region21
    $region20: #{tpu_custom_call.1} parent=1 // pred_region
      %s1580 = ssub.s32 16384, 16384
      %1581 = vsyncadd [#allocation4], %s1580
      %s1582 = sshll.u32 [#allocation7], 4
      %s1583 = int_to_ptr.vmem [resolvable:$true] %s1582
      %1588 = dma.vmem_to_hbm [thread:$0]  %s1583, 16384, %s2, [#allocation4], 128, 128, 8
    $region21: #{tpu_custom_call.1} parent=1 // pred_fallthru
      _
    // Predicated region
    $region22: #{tpu_custom_call.1} parent=1 // pred_check
      _
    $region23: #{tpu_custom_call.1} parent=1 // pred_check_branch
      %1590 = sbr.rel (0) target = $region25
    $region24: #{tpu_custom_call.1} parent=1 // pred_region
      %1591 = dma.done [#allocation4], 16384
    $region25: #{tpu_custom_call.1} parent=1 // pred_fallthru
      _
    %1592 = vsyncpa [#allocation3], 1
    %1593 = vsyncpa [#allocation6], 1
    %1594 = vsyncpa [#allocation4], 1

</llo_original>
